<compile_context>
chip_gen: v7x
topology: tpu7x:2x2x1
jax: 0.10.0
libtpu: 0.0.40
codegen_flags: <defaults>
</compile_context>

<pallas_src>
import jax
import jax.numpy as jnp
from jax.experimental import pallas as pl
from jax.experimental.pallas import tpu as pltpu

LS = 50  # hidden width, matches `ls = 50` in the reference module


def _round_up(v, m):
    return -(-v // m) * m


def _tensorcores_per_chip():
    """Best-effort TensorCore count per chip (v7x=2, v5e/v6e=1)."""
    try:
        info = pltpu.get_tpu_info()
        for attr in ("num_cores", "core_count", "tensorcores_per_chip",
                     "num_tensorcores"):
            v = getattr(info, attr, None)
            if isinstance(v, int) and v > 0:
                return v
    except Exception:
        pass
    try:
        d = jax.devices()[0]
        for attr in ("num_cores", "core_count"):
            v = getattr(d, attr, None)
            if isinstance(v, int) and v > 0:
                return v
    except Exception:
        pass
    return 1


def _auto_compute_dtype():
    """bf16 activations/tanh on chips with a bf16 EUP/VPU (v6e/v7x); f32 on v5e."""
    try:
        kind = jax.devices()[0].device_kind.lower()
    except Exception:
        kind = ""
    if "v5 lite" in kind or "v5litepod" in kind or "v5e" in kind:
        return jnp.float32
    return jnp.bfloat16


def _choose_tile(N, tm, num_cores):
    """Batch tile (multiple of 128).

    Single-core (v5e/v6e): one big tile per cdiv(N, tm) step, no padded extras.
    Multi-core (v7x): shrink so each core gets >= 2 'parallel' steps (pipeline
    steady state), but never below 256 lanes so per-step overhead stays amortized.
    """
    tm = max(128, (tm // 128) * 128)
    n_up = _round_up(N, 128)
    if num_cores <= 1:
        return min(tm, n_up)
    target_tiles = 2 * num_cores
    per_tile = max(256, _round_up(-(-N // target_tiles), 128))
    return max(128, min(tm, per_tile, n_up))


def _mlp_kernel(x_ref, wh_ref, bh_ref, sp_ref, o_ref):
    x = x_ref[...]                                   # (1, tm) f32, lane-dense batch
    cdt = wh_ref.dtype                               # compute dtype (bf16 or f32)

    w1 = sp_ref[:, 0:1]                              # (50, 1)
    b1 = sp_ref[:, 1:2]                              # (50, 1)
    w5 = sp_ref[:, 2:3]                              # (50, 1)
    b5 = sp_ref[0:1, 3:4]                            # (1, 1)

    # Layer 1: Linear(1, 50).  K=1 contraction -> VPU broadcast multiply.
    h = jnp.tanh((w1 * x + b1).astype(cdt))          # (50, tm)

    # Layers 2..4: 50x50 matmuls on the MXU (feature-major, f32 accumulation);
    # bias add in f32, tanh in `cdt` (bf16 doubles EUP throughput on v6e/v7x).
    for l in range(3):
        acc = jnp.dot(wh_ref[l], h, preferred_element_type=jnp.float32)  # (50, tm) f32
        h = jnp.tanh((acc + bh_ref[l]).astype(cdt))

    # Layer 5: Linear(50, 1).  Output width 1 -> elementwise mul + sublane reduce.
    y = jnp.sum(w5 * h.astype(jnp.float32), axis=0, keepdims=True) + b5  # (1, tm)
    o_ref[...] = y.astype(o_ref.dtype)


def network_forward(x, params, *, tm=1024, min_pallas_batch=256, compute_dtype=None):
    """Forward pass of the 5-layer tanh MLP.

    x: (N, 1) float32 (PyTorch nn.Linear convention).
    params: dict of weights/biases from init_params.
    compute_dtype: None -> auto (bf16 on v6e/v7x, f32 on v5e); or force a dtype.
    """
    N = x.shape[0]

    # Tiny batches: fixed pallas_call cost exceeds the whole compute; use XLA.
    if N < min_pallas_batch:
        return reference_forward(x, params)

    if compute_dtype is None:
        compute_dtype = _auto_compute_dtype()

    num_cores = _tensorcores_per_chip()
    tm_eff = _choose_tile(N, tm, num_cores)
    n_tiles = pl.cdiv(N, tm_eff)
    n_pad = n_tiles * tm_eff

    # Feature-major, lane-dense input: (1, n_pad).
    x_fm = jnp.pad(x.reshape(-1), (0, n_pad - N)).reshape(1, n_pad)

    # Pack parameters: 3 arrays instead of 11 -> fewer BlockSpecs / less per-step
    # bookkeeping.  Hidden weights are pre-cast once to the compute dtype.
    wh = jnp.stack([params["w2"], params["w3"], params["w4"]]).astype(compute_dtype)  # (3,50,50)
    bh = jnp.stack([params["b2"], params["b3"], params["b4"]])                        # (3,50,1) f32
    sp = jnp.concatenate(
        [params["w1"], params["b1"], params["w5"],
         jnp.pad(params["b5"], ((0, LS - 1), (0, 0)))], axis=1)                        # (50,4) f32

    weight_bytes = (wh.size * jnp.dtype(compute_dtype).itemsize
                    + bh.size * 4 + sp.size * 4)
    cost = pl.CostEstimate(
        flops=2 * n_pad * (3 * LS * LS + 2 * LS),
        transcendentals=4 * LS * n_pad,
        bytes_accessed=4 * 2 * n_pad + weight_bytes,
    )

    out_fm = pl.pallas_call(
        _mlp_kernel,
        out_shape=jax.ShapeDtypeStruct((1, n_pad), jnp.float32),
        grid_spec=pltpu.PrefetchScalarGridSpec(
            num_scalar_prefetch=0,
            grid=(n_tiles,),
            in_specs=[
                pl.BlockSpec((1, tm_eff), lambda i: (0, i)),   # x tile (lane-dense)
                pl.BlockSpec(wh.shape, lambda i: (0, 0, 0)),   # revisited full blocks
                pl.BlockSpec(bh.shape, lambda i: (0, 0, 0)),
                pl.BlockSpec(sp.shape, lambda i: (0, 0)),
            ],
            out_specs=pl.BlockSpec((1, tm_eff), lambda i: (0, i)),
        ),
        compiler_params=pltpu.CompilerParams(
            dimension_semantics=("parallel",),
        ),
        cost_estimate=cost,
    )(x_fm, wh, bh, sp)

    return out_fm[0, :N].reshape(N, 1)


def init_params(key):
    """Deterministic init mimicking nn.Linear's U(-1/sqrt(fan_in), 1/sqrt(fan_in)).

    Layouts: w1..w4 as (out, in) (torch layout), b1..b4 as (out, 1),
    w5 stored transposed as (in, 1), b5 as (1, 1).
    """
    params = {}
    dims = [(LS, 1), (LS, LS), (LS, LS), (LS, LS)]
    for idx, (fan_out, fan_in) in enumerate(dims, start=1):
        key, kw, kb = jax.random.split(key, 3)
        bound = 1.0 / jnp.sqrt(float(fan_in))
        params[f"w{idx}"] = jax.random.uniform(
            kw, (fan_out, fan_in), jnp.float32, minval=-bound, maxval=bound)
        params[f"b{idx}"] = jax.random.uniform(
            kb, (fan_out, 1), jnp.float32, minval=-bound, maxval=bound)

    key, kw, kb = jax.random.split(key, 3)
    bound = 1.0 / jnp.sqrt(float(LS))
    params["w5"] = jax.random.uniform(
        kw, (LS, 1), jnp.float32, minval=-bound, maxval=bound)
    params["b5"] = jax.random.uniform(
        kb, (1, 1), jnp.float32, minval=-bound, maxval=bound)
    return params


def reference_forward(x, params):
    """Pure-JAX reference (batch-major, f32), identical math to the PyTorch module."""
    h = jnp.tanh(x @ params["w1"].T + params["b1"].T)   # (N, 50)
    h = jnp.tanh(h @ params["w2"].T + params["b2"].T)
    h = jnp.tanh(h @ params["w3"].T + params["b3"].T)
    h = jnp.tanh(h @ params["w4"].T + params["b4"].T)
    return h @ params["w5"] + params["b5"]              # (N, 1)


if __name__ == "__main__":
    key = jax.random.PRNGKey(0)
    key, kx = jax.random.split(key)

    params = init_params(key)

    # Batch of scalar inputs, consistent with Linear(1, ls) taking (N, 1).
    N = 1024
    x = jax.random.normal(kx, (N, 1), jnp.float32)
    ref = reference_forward(x, params)

    # Default (auto-dtype) Pallas path.
    out = jax.block_until_ready(network_forward(x, params))
    assert out.shape == (N, 1)
    cdt = _auto_compute_dtype()
    tol = 5e-2 if cdt == jnp.bfloat16 else 1e-4   # bf16 tanh/matmul operands
    assert jnp.allclose(out, ref, atol=tol, rtol=tol), \
        float(jnp.max(jnp.abs(out - ref)))

    # Forced-f32 Pallas path: bit-accurate check of the kernel math.
    out_f32 = jax.block_until_ready(
        network_forward(x, params, compute_dtype=jnp.float32))
    assert jnp.allclose(out_f32, ref, atol=1e-4, rtol=1e-4)

    # Small-batch path (falls back to XLA; just confirm it stays correct).
    out_small = jax.block_until_ready(network_forward(x[:8], params))
    assert jnp.allclose(out_small, ref[:8], atol=1e-4, rtol=1e-4)

    print("KERNEL_OK")
</pallas_src>

<mosaic_0001>
module attributes {stable_mosaic.version = 11 : i64} {
  func.func @_mlp_kernel(%arg0: i32, %arg1: memref<1x1024xf32, #tpu.memory_space<vmem>>, %arg2: memref<3x50x50xbf16, #tpu.memory_space<vmem>>, %arg3: memref<3x50x1xf32, #tpu.memory_space<vmem>>, %arg4: memref<50x4xf32, #tpu.memory_space<vmem>>, %arg5: memref<1x1024xf32, #tpu.memory_space<vmem>>) attributes {dimension_semantics = [#tpu.dimension_semantics<parallel>], iteration_bounds = array<i64: 1>, scalar_prefetch = 0 : i64, scratch_operands = 0 : i64, tpu.core_type = #tpu.core_type<tc>, window_params = [{transform_indices = @transform_0, window_bounds = array<i64: 1, 1024>}, {pipeline_mode = #tpu.pipeline_mode<synchronous>, transform_indices = @transform_1, window_bounds = array<i64: 3, 50, 50>}, {pipeline_mode = #tpu.pipeline_mode<synchronous>, transform_indices = @transform_2, window_bounds = array<i64: 3, 50, 1>}, {pipeline_mode = #tpu.pipeline_mode<synchronous>, transform_indices = @transform_3, window_bounds = array<i64: 50, 4>}, {transform_indices = @transform_4, window_bounds = array<i64: 1, 1024>}]} {
    %c0 = arith.constant 0 : index
    %c0_0 = arith.constant 0 : index
    %0 = vector.load %arg1[%c0, %c0_0] : memref<1x1024xf32, #tpu.memory_space<vmem>>, vector<1x1024xf32>
    %c0_1 = arith.constant 0 : index
    %c0_2 = arith.constant 0 : index
    %1 = vector.load %arg4[%c0_1, %c0_2] : memref<50x4xf32, #tpu.memory_space<vmem>>, vector<50x1xf32>
    %c0_3 = arith.constant 0 : index
    %c1 = arith.constant 1 : index
    %2 = vector.load %arg4[%c0_3, %c1] : memref<50x4xf32, #tpu.memory_space<vmem>>, vector<50x1xf32>
    %c0_4 = arith.constant 0 : index
    %c2 = arith.constant 2 : index
    %3 = vector.load %arg4[%c0_4, %c2] : memref<50x4xf32, #tpu.memory_space<vmem>>, vector<50x1xf32>
    %c0_5 = arith.constant 0 : index
    %c3 = arith.constant 3 : index
    %4 = vector.load %arg4[%c0_5, %c3] : memref<50x4xf32, #tpu.memory_space<vmem>>, vector<1x1xf32>
    %5 = vector.broadcast %1 : vector<50x1xf32> to vector<50x1024xf32>
    %6 = vector.broadcast %0 : vector<1x1024xf32> to vector<50x1024xf32>
    %7 = arith.mulf %5, %6 : vector<50x1024xf32>
    %8 = vector.broadcast %2 : vector<50x1xf32> to vector<50x1024xf32>
    %9 = arith.addf %7, %8 : vector<50x1024xf32>
    %10 = arith.truncf %9 : vector<50x1024xf32> to vector<50x1024xbf16>
    %11 = math.tanh %10 : vector<50x1024xbf16>
    %c0_6 = arith.constant 0 : index
    %c0_7 = arith.constant 0 : index
    %c0_8 = arith.constant 0 : index
    %12 = vector.load %arg2[%c0_6, %c0_7, %c0_8] : memref<3x50x50xbf16, #tpu.memory_space<vmem>>, vector<1x50x50xbf16>
    %13 = vector.shape_cast %12 : vector<1x50x50xbf16> to vector<50x50xbf16>
    %cst = arith.constant dense<0.000000e+00> : vector<50x1024xf32>
    %14 = tpu.matmul %13, %11, %cst {dimension_numbers = #tpu.dot_dimension_numbers<[1], [0], [0], [1], [0, 0, 1, 1], [], []>} : vector<50x50xbf16>, vector<50x1024xbf16>, vector<50x1024xf32> -> vector<50x1024xf32>
    %c0_9 = arith.constant 0 : index
    %c0_10 = arith.constant 0 : index
    %c0_11 = arith.constant 0 : index
    %15 = vector.load %arg3[%c0_9, %c0_10, %c0_11] : memref<3x50x1xf32, #tpu.memory_space<vmem>>, vector<1x50x1xf32>
    %16 = vector.shape_cast %15 : vector<1x50x1xf32> to vector<50x1xf32>
    %17 = vector.broadcast %16 : vector<50x1xf32> to vector<50x1024xf32>
    %18 = arith.addf %14, %17 : vector<50x1024xf32>
    %19 = arith.truncf %18 : vector<50x1024xf32> to vector<50x1024xbf16>
    %20 = math.tanh %19 : vector<50x1024xbf16>
    %c1_12 = arith.constant 1 : index
    %c0_13 = arith.constant 0 : index
    %c0_14 = arith.constant 0 : index
    %21 = vector.load %arg2[%c1_12, %c0_13, %c0_14] : memref<3x50x50xbf16, #tpu.memory_space<vmem>>, vector<1x50x50xbf16>
    %22 = vector.shape_cast %21 : vector<1x50x50xbf16> to vector<50x50xbf16>
    %cst_15 = arith.constant dense<0.000000e+00> : vector<50x1024xf32>
    %23 = tpu.matmul %22, %20, %cst_15 {dimension_numbers = #tpu.dot_dimension_numbers<[1], [0], [0], [1], [0, 0, 1, 1], [], []>} : vector<50x50xbf16>, vector<50x1024xbf16>, vector<50x1024xf32> -> vector<50x1024xf32>
    %c1_16 = arith.constant 1 : index
    %c0_17 = arith.constant 0 : index
    %c0_18 = arith.constant 0 : index
    %24 = vector.load %arg3[%c1_16, %c0_17, %c0_18] : memref<3x50x1xf32, #tpu.memory_space<vmem>>, vector<1x50x1xf32>
    %25 = vector.shape_cast %24 : vector<1x50x1xf32> to vector<50x1xf32>
    %26 = vector.broadcast %25 : vector<50x1xf32> to vector<50x1024xf32>
    %27 = arith.addf %23, %26 : vector<50x1024xf32>
    %28 = arith.truncf %27 : vector<50x1024xf32> to vector<50x1024xbf16>
    %29 = math.tanh %28 : vector<50x1024xbf16>
    %c2_19 = arith.constant 2 : index
    %c0_20 = arith.constant 0 : index
    %c0_21 = arith.constant 0 : index
    %30 = vector.load %arg2[%c2_19, %c0_20, %c0_21] : memref<3x50x50xbf16, #tpu.memory_space<vmem>>, vector<1x50x50xbf16>
    %31 = vector.shape_cast %30 : vector<1x50x50xbf16> to vector<50x50xbf16>
    %cst_22 = arith.constant dense<0.000000e+00> : vector<50x1024xf32>
    %32 = tpu.matmul %31, %29, %cst_22 {dimension_numbers = #tpu.dot_dimension_numbers<[1], [0], [0], [1], [0, 0, 1, 1], [], []>} : vector<50x50xbf16>, vector<50x1024xbf16>, vector<50x1024xf32> -> vector<50x1024xf32>
    %c2_23 = arith.constant 2 : index
    %c0_24 = arith.constant 0 : index
    %c0_25 = arith.constant 0 : index
    %33 = vector.load %arg3[%c2_23, %c0_24, %c0_25] : memref<3x50x1xf32, #tpu.memory_space<vmem>>, vector<1x50x1xf32>
    %34 = vector.shape_cast %33 : vector<1x50x1xf32> to vector<50x1xf32>
    %35 = vector.broadcast %34 : vector<50x1xf32> to vector<50x1024xf32>
    %36 = arith.addf %32, %35 : vector<50x1024xf32>
    %37 = arith.truncf %36 : vector<50x1024xf32> to vector<50x1024xbf16>
    %38 = math.tanh %37 : vector<50x1024xbf16>
    %39 = arith.extf %38 : vector<50x1024xbf16> to vector<50x1024xf32>
    %40 = vector.broadcast %3 : vector<50x1xf32> to vector<50x1024xf32>
    %41 = arith.mulf %40, %39 : vector<50x1024xf32>
    %cst_26 = arith.constant dense<0.000000e+00> : vector<1024xf32>
    %42 = vector.multi_reduction <add>, %41, %cst_26 [0] : vector<50x1024xf32> to vector<1024xf32>
    %43 = vector.shape_cast %42 : vector<1024xf32> to vector<1x1024xf32>
    %44 = vector.broadcast %4 : vector<1x1xf32> to vector<1x1024xf32>
    %45 = arith.addf %43, %44 : vector<1x1024xf32>
    %c0_27 = arith.constant 0 : index
    %c0_28 = arith.constant 0 : index
    %46 = vector.load %arg5[%c0_27, %c0_28] : memref<1x1024xf32, #tpu.memory_space<vmem>>, vector<1x1024xf32>
    tpu.vector_store %arg5[%c0_27, %c0_28], %45 {strides = array<i32>} : memref<1x1024xf32, #tpu.memory_space<vmem>>, vector<1x1024xf32>,
    return
  }
  func.func @transform_0(%arg0: i32) -> (i32, i32) {
    %c0_i32 = arith.constant 0 : i32
    %c0_i32_0 = arith.constant 0 : i32
    return %c0_i32, %arg0 : i32, i32
  }
  func.func @transform_1(%arg0: i32) -> (i32, i32, i32) {
    %c0_i32 = arith.constant 0 : i32
    %c0_i32_0 = arith.constant 0 : i32
    %c0_i32_1 = arith.constant 0 : i32
    %c0_i32_2 = arith.constant 0 : i32
    return %c0_i32, %c0_i32_0, %c0_i32_1 : i32, i32, i32
  }
  func.func @transform_2(%arg0: i32) -> (i32, i32, i32) {
    %c0_i32 = arith.constant 0 : i32
    %c0_i32_0 = arith.constant 0 : i32
    %c0_i32_1 = arith.constant 0 : i32
    %c0_i32_2 = arith.constant 0 : i32
    return %c0_i32, %c0_i32_0, %c0_i32_1 : i32, i32, i32
  }
  func.func @transform_3(%arg0: i32) -> (i32, i32) {
    %c0_i32 = arith.constant 0 : i32
    %c0_i32_0 = arith.constant 0 : i32
    %c0_i32_1 = arith.constant 0 : i32
    return %c0_i32, %c0_i32_0 : i32, i32
  }
  func.func @transform_4(%arg0: i32) -> (i32, i32) {
    %c0_i32 = arith.constant 0 : i32
    %c0_i32_0 = arith.constant 0 : i32
    return %c0_i32, %arg0 : i32, i32
  }
}

</mosaic_0001>

<llo_original>
// kernel: tpu_custom_call.1
$region0: #{tpu_custom_call.1}
  #allocation0 [shape = 'u32[]', space=smem, size = 0x4, offset = 0x4, fixed_abs, tag = 'smem constant byte address 0x4 - core index']
  #allocation1 [shape = 'u32[144,128]{1,0:T(1,128)}', space=vmem, size = 0x12000, scoped, tag = 'internal scratch']
  %s0 = inlined_call_operand.vmem [shape: f32[1,1024], index: 0, kind: input, shape index: {}]
  %s1 = inlined_call_operand.vmem [shape: bf16[3,50,50], index: 1, kind: input, shape index: {}]
  %s2 = inlined_call_operand.vmem [shape: f32[3,50,1], index: 2, kind: input, shape index: {}]
  %s3 = inlined_call_operand.vmem [shape: f32[50,4], index: 3, kind: input, shape index: {}]
  %s4 = inlined_call_operand.hbm [shape: f32[1,1024], index: 4, kind: output, shape index: {}]
  %s5 = sld [smem:[#allocation0]]
  $region26: #{tpu_custom_call.1} parent=0
    _
  %s7 = ssub.s32 1, %s5
  %s8 = scalar_select 0, %s7, %s5
  $region1: #{tpu_custom_call.1} parent=0
    #allocation2 [shape = 'u8[4096]{0}', space=vmem, size = 0x1000, scoped, tag = 'output window, operand 0, single buffered']
    #allocation3 [shape = 's32[1]{0}', space=sflag, size = 0x4, scoped, tag = 'scoped memory for tpu_custom_call.1']
    %9 = vsyncpa [#allocation3], 0
    // Predicated region
    $region2: #{tpu_custom_call.1} parent=1 // pred_check
      _
    $region3: #{tpu_custom_call.1} parent=1 // pred_check_branch
      %11 = sbr.rel (0) target = $region5
    $region4: #{tpu_custom_call.1} parent=1 // pred_region
      _
    $region5: #{tpu_custom_call.1} parent=1 // pred_fallthru
      _
    // Predicated region
    $region6: #{tpu_custom_call.1} parent=1 // pred_check
      _
    $region7: #{tpu_custom_call.1} parent=1 // pred_check_branch
      %13 = sbr.rel (0) target = $region9
    $region8: #{tpu_custom_call.1} parent=1 // pred_region
      _
    $region9: #{tpu_custom_call.1} parent=1 // pred_fallthru
      _
    // Predicated region
    $region10: #{tpu_custom_call.1} parent=1 // pred_check
      _
    $region11: #{tpu_custom_call.1} parent=1 // pred_check_branch
      %15 = sbr.rel (0) target = $region13
    $region12: #{tpu_custom_call.1} parent=1 // pred_region
      _
    $region13: #{tpu_custom_call.1} parent=1 // pred_fallthru
      _
    // Predicated region
    $region14: #{tpu_custom_call.1} parent=1 // pred_check
      _
    $region15: #{tpu_custom_call.1} parent=1 // pred_check_branch
      %17 = sbr.rel (0) target = $region17
    $region16: #{tpu_custom_call.1} parent=1 // pred_region
      _
    $region17: #{tpu_custom_call.1} parent=1 // pred_fallthru
      _
    %v19 = vld [vmem:[%s0] sm:$0xff]
    %v20 = vld [vmem:[%s3] sm:$0xff]
    %v21 = vld [vmem:[%s3 + $0x8] sm:$0xff]
    %v22 = vld [vmem:[%s3 + $0x10] sm:$0xff]
    %v23 = vld [vmem:[%s3 + $0x18] sm:$0xff]
    %v24 = vld [vmem:[%s3 + $0x20] sm:$0xff]
    %v25 = vld [vmem:[%s3 + $0x28] sm:$0xff]
    %v26 = vld [vmem:[%s3 + $0x30] sm:$0x3]
    %v27 = vld [vmem:[%s3] sm:$0x1]
    %29 = vset.pattern.permute.xlu0 0
    %30 = vperm.xlu0 %29, %v20
    %v31 = vpop.permute.xlu0 %30
    %34 = vset.pattern.permute.xlu0 0
    %35 = vperm.xlu0 %34, %v21
    %v36 = vpop.permute.xlu0 %35
    %39 = vset.pattern.permute.xlu0 0
    %40 = vperm.xlu0 %39, %v22
    %v41 = vpop.permute.xlu0 %40
    %44 = vset.pattern.permute.xlu0 0
    %45 = vperm.xlu0 %44, %v23
    %v46 = vpop.permute.xlu0 %45
    %49 = vset.pattern.permute.xlu0 0
    %50 = vperm.xlu0 %49, %v24
    %v51 = vpop.permute.xlu0 %50
    %54 = vset.pattern.permute.xlu0 0
    %55 = vperm.xlu0 %54, %v25
    %v56 = vpop.permute.xlu0 %55
    %59 = vset.pattern.permute.xlu0 0
    %60 = vperm.xlu0 %59, %v26
    %v61 = vpop.permute.xlu0 %60
    %v64 = vlaneseq
    %v65 = vshrl.u32 %v64, 7
    %v66 = vsub.s32 0, %v65
    %v67 = vrot.slane %v19, %v66
    %v68 = vlaneseq
    %v69 = vshrl.u32 %v68, 7
    %v70 = vsub.s32 1, %v69
    %v71 = vrot.slane %v19, %v70
    %v72 = vlaneseq
    %v73 = vshrl.u32 %v72, 7
    %v74 = vsub.s32 2, %v73
    %v75 = vrot.slane %v19, %v74
    %v76 = vlaneseq
    %v77 = vshrl.u32 %v76, 7
    %v78 = vsub.s32 3, %v77
    %v79 = vrot.slane %v19, %v78
    %v80 = vlaneseq
    %v81 = vshrl.u32 %v80, 7
    %v82 = vsub.s32 4, %v81
    %v83 = vrot.slane %v19, %v82
    %v84 = vlaneseq
    %v85 = vshrl.u32 %v84, 7
    %v86 = vsub.s32 5, %v85
    %v87 = vrot.slane %v19, %v86
    %v88 = vlaneseq
    %v89 = vshrl.u32 %v88, 7
    %v90 = vsub.s32 6, %v89
    %v91 = vrot.slane %v19, %v90
    %v92 = vlaneseq
    %v93 = vshrl.u32 %v92, 7
    %v94 = vsub.s32 7, %v93
    %v95 = vrot.slane %v19, %v94
    %v104 = vmul.f32 %v31, %v67
    %v105 = vmul.f32 %v31, %v71
    %v106 = vmul.f32 %v31, %v75
    %v107 = vmul.f32 %v31, %v79
    %v108 = vmul.f32 %v31, %v83
    %v109 = vmul.f32 %v31, %v87
    %v110 = vmul.f32 %v31, %v91
    %v111 = vmul.f32 %v31, %v95
    %v112 = vmul.f32 %v36, %v67
    %v113 = vmul.f32 %v36, %v71
    %v114 = vmul.f32 %v36, %v75
    %v115 = vmul.f32 %v36, %v79
    %v116 = vmul.f32 %v36, %v83
    %v117 = vmul.f32 %v36, %v87
    %v118 = vmul.f32 %v36, %v91
    %v119 = vmul.f32 %v36, %v95
    %v120 = vmul.f32 %v41, %v67
    %v121 = vmul.f32 %v41, %v71
    %v122 = vmul.f32 %v41, %v75
    %v123 = vmul.f32 %v41, %v79
    %v124 = vmul.f32 %v41, %v83
    %v125 = vmul.f32 %v41, %v87
    %v126 = vmul.f32 %v41, %v91
    %v127 = vmul.f32 %v41, %v95
    %v128 = vmul.f32 %v46, %v67
    %v129 = vmul.f32 %v46, %v71
    %v130 = vmul.f32 %v46, %v75
    %v131 = vmul.f32 %v46, %v79
    %v132 = vmul.f32 %v46, %v83
    %v133 = vmul.f32 %v46, %v87
    %v134 = vmul.f32 %v46, %v91
    %v135 = vmul.f32 %v46, %v95
    %v136 = vmul.f32 %v51, %v67
    %v137 = vmul.f32 %v51, %v71
    %v138 = vmul.f32 %v51, %v75
    %v139 = vmul.f32 %v51, %v79
    %v140 = vmul.f32 %v51, %v83
    %v141 = vmul.f32 %v51, %v87
    %v142 = vmul.f32 %v51, %v91
    %v143 = vmul.f32 %v51, %v95
    %v144 = vmul.f32 %v56, %v67
    %v145 = vmul.f32 %v56, %v71
    %v146 = vmul.f32 %v56, %v75
    %v147 = vmul.f32 %v56, %v79
    %v148 = vmul.f32 %v56, %v83
    %v149 = vmul.f32 %v56, %v87
    %v150 = vmul.f32 %v56, %v91
    %v151 = vmul.f32 %v56, %v95
    %v152 = vmul.f32 %v61, %v67
    %v153 = vmul.f32 %v61, %v71
    %v154 = vmul.f32 %v61, %v75
    %v155 = vmul.f32 %v61, %v79
    %v156 = vmul.f32 %v61, %v83
    %v157 = vmul.f32 %v61, %v87
    %v158 = vmul.f32 %v61, %v91
    %v159 = vmul.f32 %v61, %v95
    %160 = vset.pattern.permute.xlu0 1
    %161 = vperm.xlu0 %160, %v20
    %v162 = vpop.permute.xlu0 %161
    %164 = vset.pattern.permute.xlu0 1
    %165 = vperm.xlu0 %164, %v21
    %v166 = vpop.permute.xlu0 %165
    %168 = vset.pattern.permute.xlu0 1
    %169 = vperm.xlu0 %168, %v22
    %v170 = vpop.permute.xlu0 %169
    %172 = vset.pattern.permute.xlu0 1
    %173 = vperm.xlu0 %172, %v23
    %v174 = vpop.permute.xlu0 %173
    %176 = vset.pattern.permute.xlu0 1
    %177 = vperm.xlu0 %176, %v24
    %v178 = vpop.permute.xlu0 %177
    %180 = vset.pattern.permute.xlu0 1
    %181 = vperm.xlu0 %180, %v25
    %v182 = vpop.permute.xlu0 %181
    %184 = vset.pattern.permute.xlu0 1
    %185 = vperm.xlu0 %184, %v26
    %v186 = vpop.permute.xlu0 %185
    %v188 = vadd.f32 %v104, %v162
    %v189 = vadd.f32 %v105, %v162
    %v190 = vadd.f32 %v106, %v162
    %v191 = vadd.f32 %v107, %v162
    %v192 = vadd.f32 %v108, %v162
    %v193 = vadd.f32 %v109, %v162
    %v194 = vadd.f32 %v110, %v162
    %v195 = vadd.f32 %v111, %v162
    %v196 = vadd.f32 %v112, %v166
    %v197 = vadd.f32 %v113, %v166
    %v198 = vadd.f32 %v114, %v166
    %v199 = vadd.f32 %v115, %v166
    %v200 = vadd.f32 %v116, %v166
    %v201 = vadd.f32 %v117, %v166
    %v202 = vadd.f32 %v118, %v166
    %v203 = vadd.f32 %v119, %v166
    %v204 = vadd.f32 %v120, %v170
    %v205 = vadd.f32 %v121, %v170
    %v206 = vadd.f32 %v122, %v170
    %v207 = vadd.f32 %v123, %v170
    %v208 = vadd.f32 %v124, %v170
    %v209 = vadd.f32 %v125, %v170
    %v210 = vadd.f32 %v126, %v170
    %v211 = vadd.f32 %v127, %v170
    %v212 = vadd.f32 %v128, %v174
    %v213 = vadd.f32 %v129, %v174
    %v214 = vadd.f32 %v130, %v174
    %v215 = vadd.f32 %v131, %v174
    %v216 = vadd.f32 %v132, %v174
    %v217 = vadd.f32 %v133, %v174
    %v218 = vadd.f32 %v134, %v174
    %v219 = vadd.f32 %v135, %v174
    %v220 = vadd.f32 %v136, %v178
    %v221 = vadd.f32 %v137, %v178
    %v222 = vadd.f32 %v138, %v178
    %v223 = vadd.f32 %v139, %v178
    %v224 = vadd.f32 %v140, %v178
    %v225 = vadd.f32 %v141, %v178
    %v226 = vadd.f32 %v142, %v178
    %v227 = vadd.f32 %v143, %v178
    %v228 = vadd.f32 %v144, %v182
    %v229 = vadd.f32 %v145, %v182
    %v230 = vadd.f32 %v146, %v182
    %v231 = vadd.f32 %v147, %v182
    %v232 = vadd.f32 %v148, %v182
    %v233 = vadd.f32 %v149, %v182
    %v234 = vadd.f32 %v150, %v182
    %v235 = vadd.f32 %v151, %v182
    %v236 = vadd.f32 %v152, %v186
    %v237 = vadd.f32 %v153, %v186
    %v238 = vadd.f32 %v154, %v186
    %v239 = vadd.f32 %v155, %v186
    %v240 = vadd.f32 %v156, %v186
    %v241 = vadd.f32 %v157, %v186
    %v242 = vadd.f32 %v158, %v186
    %v243 = vadd.f32 %v159, %v186
    %v244 = vpack.c.bf16 %v196, %v188
    %v245 = vpack.c.bf16 %v197, %v189
    %v246 = vpack.c.bf16 %v198, %v190
    %v247 = vpack.c.bf16 %v199, %v191
    %v248 = vpack.c.bf16 %v200, %v192
    %v249 = vpack.c.bf16 %v201, %v193
    %v250 = vpack.c.bf16 %v202, %v194
    %v251 = vpack.c.bf16 %v203, %v195
    %v252 = vpack.c.bf16 %v212, %v204
    %v253 = vpack.c.bf16 %v213, %v205
    %v254 = vpack.c.bf16 %v214, %v206
    %v255 = vpack.c.bf16 %v215, %v207
    %v256 = vpack.c.bf16 %v216, %v208
    %v257 = vpack.c.bf16 %v217, %v209
    %v258 = vpack.c.bf16 %v218, %v210
    %v259 = vpack.c.bf16 %v219, %v211
    %v260 = vpack.c.bf16 %v228, %v220
    %v261 = vpack.c.bf16 %v229, %v221
    %v262 = vpack.c.bf16 %v230, %v222
    %v263 = vpack.c.bf16 %v231, %v223
    %v264 = vpack.c.bf16 %v232, %v224
    %v265 = vpack.c.bf16 %v233, %v225
    %v266 = vpack.c.bf16 %v234, %v226
    %v267 = vpack.c.bf16 %v235, %v227
    %v268 = vpack.c.bf16 %v236, %v236
    %v269 = vpack.c.bf16 %v237, %v237
    %v270 = vpack.c.bf16 %v238, %v238
    %v271 = vpack.c.bf16 %v239, %v239
    %v272 = vpack.c.bf16 %v240, %v240
    %v273 = vpack.c.bf16 %v241, %v241
    %v274 = vpack.c.bf16 %v242, %v242
    %v275 = vpack.c.bf16 %v243, %v243
    %v276 = vtanh.bf16.pop %v244
    %v277 = vtanh.bf16.pop %v245
    %v278 = vtanh.bf16.pop %v246
    %v279 = vtanh.bf16.pop %v247
    %v280 = vtanh.bf16.pop %v248
    %v281 = vtanh.bf16.pop %v249
    %v282 = vtanh.bf16.pop %v250
    %v283 = vtanh.bf16.pop %v251
    %v284 = vtanh.bf16.pop %v252
    %v285 = vtanh.bf16.pop %v253
    %v286 = vtanh.bf16.pop %v254
    %v287 = vtanh.bf16.pop %v255
    %v288 = vtanh.bf16.pop %v256
    %v289 = vtanh.bf16.pop %v257
    %v290 = vtanh.bf16.pop %v258
    %v291 = vtanh.bf16.pop %v259
    %v292 = vtanh.bf16.pop %v260
    %v293 = vtanh.bf16.pop %v261
    %v294 = vtanh.bf16.pop %v262
    %v295 = vtanh.bf16.pop %v263
    %v296 = vtanh.bf16.pop %v264
    %v297 = vtanh.bf16.pop %v265
    %v298 = vtanh.bf16.pop %v266
    %v299 = vtanh.bf16.pop %v267
    %v300 = vtanh.bf16.pop %v268
    %v301 = vtanh.bf16.pop %v269
    %v302 = vtanh.bf16.pop %v270
    %v303 = vtanh.bf16.pop %v271
    %v304 = vtanh.bf16.pop %v272
    %v305 = vtanh.bf16.pop %v273
    %v306 = vtanh.bf16.pop %v274
    %v307 = vtanh.bf16.pop %v275
    %v308 = vld [vmem:[%s1] sm:$0xf]
    %v309 = vld [vmem:[%s1 + $0x4] sm:$0xf]
    %v310 = vld [vmem:[%s1 + $0x8] sm:$0xf]
    %v311 = vld [vmem:[%s1 + $0xc] sm:$0xf]
    %v312 = vld [vmem:[%s1 + $0x10] sm:$0xf]
    %v313 = vld [vmem:[%s1 + $0x14] sm:$0xf]
    %v314 = vld [vmem:[%s1 + $0x18] sm:$0x1]
    %v315 = vld [vmem:[%s2] sm:$0xff]
    %v316 = vld [vmem:[%s2 + $0x8] sm:$0xff]
    %v317 = vld [vmem:[%s2 + $0x10] sm:$0xff]
    %v318 = vld [vmem:[%s2 + $0x18] sm:$0xff]
    %v319 = vld [vmem:[%s2 + $0x20] sm:$0xff]
    %v320 = vld [vmem:[%s2 + $0x28] sm:$0xff]
    %v321 = vld [vmem:[%s2 + $0x30] sm:$0x3]
    %323 = vset.pattern.permute.xlu0 0
    %324 = vperm.xlu0 %323, %v315
    %v325 = vpop.permute.xlu0 %324
    %328 = vset.pattern.permute.xlu0 0
    %329 = vperm.xlu0 %328, %v316
    %v330 = vpop.permute.xlu0 %329
    %333 = vset.pattern.permute.xlu0 0
    %334 = vperm.xlu0 %333, %v317
    %v335 = vpop.permute.xlu0 %334
    %338 = vset.pattern.permute.xlu0 0
    %339 = vperm.xlu0 %338, %v318
    %v340 = vpop.permute.xlu0 %339
    %343 = vset.pattern.permute.xlu0 0
    %344 = vperm.xlu0 %343, %v319
    %v345 = vpop.permute.xlu0 %344
    %348 = vset.pattern.permute.xlu0 0
    %349 = vperm.xlu0 %348, %v320
    %v350 = vpop.permute.xlu0 %349
    %353 = vset.pattern.permute.xlu0 0
    %354 = vperm.xlu0 %353, %v321
    %v355 = vpop.permute.xlu0 %354
    %v364 = vunpack.c.l.b16 %v308
    %v365 = vunpack.c.l.b16 %v309
    %v366 = vunpack.c.l.b16 %v310
    %v367 = vunpack.c.l.b16 %v311
    %v368 = vunpack.c.l.b16 %v312
    %v369 = vunpack.c.l.b16 %v313
    %v370 = vunpack.c.l.b16 %v314
    %v371 = vpack.c.b16 %v365, %v364
    %v372 = vpack.c.b16 %v367, %v366
    %v373 = vpack.c.b16 %v369, %v368
    %v374 = vpack.c.b16 %v370, %v370
    %vm375 = vcmask 408576
    %v377 = vsel %vm375, %v371, 0
    %v380 = vsel %vm375, %v372, 0
    %v383 = vsel %vm375, %v373, 0
    %v386 = vsel %vm375, %v374, 0
    %vm388 = vcmask 1040384
    %v390 = vsel %vm388, %v300, 0
    %v393 = vsel %vm388, %v301, 0
    %v396 = vsel %vm388, %v302, 0
    %v399 = vsel %vm388, %v303, 0
    %v402 = vsel %vm388, %v304, 0
    %v405 = vsel %vm388, %v305, 0
    %v408 = vsel %vm388, %v306, 0
    %v411 = vsel %vm388, %v307, 0
    %413 = vmatprep.subr.bf16.mxu0 %v277
    %414 = vmatpush1.bf16.msra.mxu0 %v276
    %415 = vmatprep.subr.bf16.mxu0 %v285
    %416 = vmatpush1.bf16.msra.mxu0 %v284
    %417 = vmatprep.subr.bf16.mxu0 %v293
    %418 = vmatpush1.bf16.msra.mxu0 %v292
    %419 = vmatprep.subr.bf16.mxu0 %v393
    %420 = vmatpush1.bf16.msra.mxu0 %v390
    %421 = vmatprep.subr.bf16.mxu0 0
    %422 = vmatpush1.bf16.msra.mxu0 0
    %423 = vmatprep.subr.bf16.mxu0 0
    %424 = vmatpush1.bf16.msra.mxu0 0
    %425 = vmatprep.subr.bf16.mxu0 0
    %426 = vmatpush1.bf16.msra.mxu0 0
    %427 = vmatprep.subr.bf16.mxu0 0
    %428 = vmatpush1.bf16.msra.mxu0 0
    %429 = vmatprep.subr.bf16.mxu0 0
    %430 = vmatpush1.bf16.msra.mxu0 0
    %431 = vmatprep.subr.bf16.mxu0 0
    %432 = vmatpush1.bf16.msra.mxu0 0
    %433 = vmatprep.subr.bf16.mxu0 0
    %434 = vmatpush1.bf16.msra.mxu0 0
    %435 = vmatprep.subr.bf16.mxu0 0
    %436 = vmatpush1.bf16.msra.mxu0 0
    %437 = vmatprep.subr.bf16.mxu0 0
    %438 = vmatpush1.bf16.msra.mxu0 0
    %439 = vmatprep.subr.bf16.mxu0 0
    %440 = vmatpush1.bf16.msra.mxu0 0
    %441 = vmatprep.subr.bf16.mxu0 0
    %442 = vmatpush1.bf16.msra.mxu0 0
    %443 = vmatprep.subr.bf16.mxu0 0
    %444 = vmatpush1.bf16.msra.mxu0 0
    %445 = vmatprep.mubr.bf16.mxu0 0
    %446 = vmatmul.mubr.bf16.gmra.mrb[0].mxu0 %v377
    %v447 = vpop.f32.mrb[0].mxu0
    %v448 = vadd.f32 %v325, %v447
    %v449 = vpop.f32.mrb[0].mxu0
    %v450 = vadd.f32 %v325, %v449
    %v451 = vpop.f32.mrb[0].mxu0
    %v452 = vadd.f32 %v330, %v451
    %v453 = vpop.f32.mrb[0].mxu0
    %v454 = vadd.f32 %v330, %v453
    %455 = vmatprep.mubr.bf16.mxu0 0
    %456 = vmatmul.mubr.bf16.gmra.mrb[0].mxu0 %v380
    %v457 = vpop.f32.mrb[0].mxu0
    %v458 = vadd.f32 %v335, %v457
    %v459 = vpop.f32.mrb[0].mxu0
    %v460 = vadd.f32 %v335, %v459
    %v461 = vpop.f32.mrb[0].mxu0
    %v462 = vadd.f32 %v340, %v461
    %v463 = vpop.f32.mrb[0].mxu0
    %v464 = vadd.f32 %v340, %v463
    %465 = vmatprep.mubr.bf16.mxu0 0
    %466 = vmatmul.mubr.bf16.gmra.mrb[0].mxu0 %v383
    %v467 = vpop.f32.mrb[0].mxu0
    %v468 = vadd.f32 %v345, %v467
    %v469 = vpop.f32.mrb[0].mxu0
    %v470 = vadd.f32 %v345, %v469
    %v471 = vpop.f32.mrb[0].mxu0
    %v472 = vadd.f32 %v350, %v471
    %v473 = vpop.f32.mrb[0].mxu0
    %v474 = vadd.f32 %v350, %v473
    %475 = vmatprep.mubr.bf16.mxu0 0
    %476 = vmatmul.mubr.bf16.gmra.mrb[0].mxu0 %v386
    %v477 = vpop.f32.mrb[0].mxu0
    %v478 = vadd.f32 %v355, %v477
    %v479 = vpop.f32.mrb[0].mxu0
    %v480 = vadd.f32 %v355, %v479
    %v481 = vpop.f32.mrb[0].mxu0
    %v482 = vpop.f32.mrb[0].mxu0
    %483 = vdwg.mxu0
    %484 = vmatprep.subr.bf16.mxu0 %v279
    %485 = vmatpush1.bf16.msra.mxu0 %v278
    %486 = vmatprep.subr.bf16.mxu0 %v287
    %487 = vmatpush1.bf16.msra.mxu0 %v286
    %488 = vmatprep.subr.bf16.mxu0 %v295
    %489 = vmatpush1.bf16.msra.mxu0 %v294
    %490 = vmatprep.subr.bf16.mxu0 %v399
    %491 = vmatpush1.bf16.msra.mxu0 %v396
    %492 = vmatprep.subr.bf16.mxu0 0
    %493 = vmatpush1.bf16.msra.mxu0 0
    %494 = vmatprep.subr.bf16.mxu0 0
    %495 = vmatpush1.bf16.msra.mxu0 0
    %496 = vmatprep.subr.bf16.mxu0 0
    %497 = vmatpush1.bf16.msra.mxu0 0
    %498 = vmatprep.subr.bf16.mxu0 0
    %499 = vmatpush1.bf16.msra.mxu0 0
    %500 = vmatprep.subr.bf16.mxu0 0
    %501 = vmatpush1.bf16.msra.mxu0 0
    %502 = vmatprep.subr.bf16.mxu0 0
    %503 = vmatpush1.bf16.msra.mxu0 0
    %504 = vmatprep.subr.bf16.mxu0 0
    %505 = vmatpush1.bf16.msra.mxu0 0
    %506 = vmatprep.subr.bf16.mxu0 0
    %507 = vmatpush1.bf16.msra.mxu0 0
    %508 = vmatprep.subr.bf16.mxu0 0
    %509 = vmatpush1.bf16.msra.mxu0 0
    %510 = vmatprep.subr.bf16.mxu0 0
    %511 = vmatpush1.bf16.msra.mxu0 0
    %512 = vmatprep.subr.bf16.mxu0 0
    %513 = vmatpush1.bf16.msra.mxu0 0
    %514 = vmatprep.subr.bf16.mxu0 0
    %515 = vmatpush1.bf16.msra.mxu0 0
    %516 = vmatprep.mubr.bf16.mxu0 0
    %517 = vmatmul.mubr.bf16.gmra.mrb[0].mxu0 %v377
    %v518 = vpop.f32.mrb[0].mxu0
    %v519 = vadd.f32 %v325, %v518
    %v520 = vpop.f32.mrb[0].mxu0
    %v521 = vadd.f32 %v325, %v520
    %v522 = vpop.f32.mrb[0].mxu0
    %v523 = vadd.f32 %v330, %v522
    %v524 = vpop.f32.mrb[0].mxu0
    %v525 = vadd.f32 %v330, %v524
    %526 = vmatprep.mubr.bf16.mxu0 0
    %527 = vmatmul.mubr.bf16.gmra.mrb[0].mxu0 %v380
    %v528 = vpop.f32.mrb[0].mxu0
    %v529 = vadd.f32 %v335, %v528
    %v530 = vpop.f32.mrb[0].mxu0
    %v531 = vadd.f32 %v335, %v530
    %v532 = vpop.f32.mrb[0].mxu0
    %v533 = vadd.f32 %v340, %v532
    %v534 = vpop.f32.mrb[0].mxu0
    %v535 = vadd.f32 %v340, %v534
    %536 = vmatprep.mubr.bf16.mxu0 0
    %537 = vmatmul.mubr.bf16.gmra.mrb[0].mxu0 %v383
    %v538 = vpop.f32.mrb[0].mxu0
    %v539 = vadd.f32 %v345, %v538
    %v540 = vpop.f32.mrb[0].mxu0
    %v541 = vadd.f32 %v345, %v540
    %v542 = vpop.f32.mrb[0].mxu0
    %v543 = vadd.f32 %v350, %v542
    %v544 = vpop.f32.mrb[0].mxu0
    %v545 = vadd.f32 %v350, %v544
    %546 = vmatprep.mubr.bf16.mxu0 0
    %547 = vmatmul.mubr.bf16.gmra.mrb[0].mxu0 %v386
    %v548 = vpop.f32.mrb[0].mxu0
    %v549 = vadd.f32 %v355, %v548
    %v550 = vpop.f32.mrb[0].mxu0
    %v551 = vadd.f32 %v355, %v550
    %v552 = vpop.f32.mrb[0].mxu0
    %v553 = vpop.f32.mrb[0].mxu0
    %554 = vdwg.mxu0
    %555 = vmatprep.subr.bf16.mxu0 %v281
    %556 = vmatpush1.bf16.msra.mxu0 %v280
    %557 = vmatprep.subr.bf16.mxu0 %v289
    %558 = vmatpush1.bf16.msra.mxu0 %v288
    %559 = vmatprep.subr.bf16.mxu0 %v297
    %560 = vmatpush1.bf16.msra.mxu0 %v296
    %561 = vmatprep.subr.bf16.mxu0 %v405
    %562 = vmatpush1.bf16.msra.mxu0 %v402
    %563 = vmatprep.subr.bf16.mxu0 0
    %564 = vmatpush1.bf16.msra.mxu0 0
    %565 = vmatprep.subr.bf16.mxu0 0
    %566 = vmatpush1.bf16.msra.mxu0 0
    %567 = vmatprep.subr.bf16.mxu0 0
    %568 = vmatpush1.bf16.msra.mxu0 0
    %569 = vmatprep.subr.bf16.mxu0 0
    %570 = vmatpush1.bf16.msra.mxu0 0
    %571 = vmatprep.subr.bf16.mxu0 0
    %572 = vmatpush1.bf16.msra.mxu0 0
    %573 = vmatprep.subr.bf16.mxu0 0
    %574 = vmatpush1.bf16.msra.mxu0 0
    %575 = vmatprep.subr.bf16.mxu0 0
    %576 = vmatpush1.bf16.msra.mxu0 0
    %577 = vmatprep.subr.bf16.mxu0 0
    %578 = vmatpush1.bf16.msra.mxu0 0
    %579 = vmatprep.subr.bf16.mxu0 0
    %580 = vmatpush1.bf16.msra.mxu0 0
    %581 = vmatprep.subr.bf16.mxu0 0
    %582 = vmatpush1.bf16.msra.mxu0 0
    %583 = vmatprep.subr.bf16.mxu0 0
    %584 = vmatpush1.bf16.msra.mxu0 0
    %585 = vmatprep.subr.bf16.mxu0 0
    %586 = vmatpush1.bf16.msra.mxu0 0
    %587 = vmatprep.mubr.bf16.mxu0 0
    %588 = vmatmul.mubr.bf16.gmra.mrb[0].mxu0 %v377
    %v589 = vpop.f32.mrb[0].mxu0
    %v590 = vadd.f32 %v325, %v589
    %v591 = vpop.f32.mrb[0].mxu0
    %v592 = vadd.f32 %v325, %v591
    %v593 = vpop.f32.mrb[0].mxu0
    %v594 = vadd.f32 %v330, %v593
    %v595 = vpop.f32.mrb[0].mxu0
    %v596 = vadd.f32 %v330, %v595
    %597 = vmatprep.mubr.bf16.mxu0 0
    %598 = vmatmul.mubr.bf16.gmra.mrb[0].mxu0 %v380
    %v599 = vpop.f32.mrb[0].mxu0
    %v600 = vadd.f32 %v335, %v599
    %v601 = vpop.f32.mrb[0].mxu0
    %v602 = vadd.f32 %v335, %v601
    %v603 = vpop.f32.mrb[0].mxu0
    %v604 = vadd.f32 %v340, %v603
    %v605 = vpop.f32.mrb[0].mxu0
    %v606 = vadd.f32 %v340, %v605
    %607 = vmatprep.mubr.bf16.mxu0 0
    %608 = vmatmul.mubr.bf16.gmra.mrb[0].mxu0 %v383
    %v609 = vpop.f32.mrb[0].mxu0
    %v610 = vadd.f32 %v345, %v609
    %v611 = vpop.f32.mrb[0].mxu0
    %v612 = vadd.f32 %v345, %v611
    %v613 = vpop.f32.mrb[0].mxu0
    %v614 = vadd.f32 %v350, %v613
    %v615 = vpop.f32.mrb[0].mxu0
    %v616 = vadd.f32 %v350, %v615
    %617 = vmatprep.mubr.bf16.mxu0 0
    %618 = vmatmul.mubr.bf16.gmra.mrb[0].mxu0 %v386
    %v619 = vpop.f32.mrb[0].mxu0
    %v620 = vadd.f32 %v355, %v619
    %v621 = vpop.f32.mrb[0].mxu0
    %v622 = vadd.f32 %v355, %v621
    %v623 = vpop.f32.mrb[0].mxu0
    %v624 = vpop.f32.mrb[0].mxu0
    %625 = vdwg.mxu0
    %626 = vmatprep.subr.bf16.mxu0 %v283
    %627 = vmatpush1.bf16.msra.mxu0 %v282
    %628 = vmatprep.subr.bf16.mxu0 %v291
    %629 = vmatpush1.bf16.msra.mxu0 %v290
    %630 = vmatprep.subr.bf16.mxu0 %v299
    %631 = vmatpush1.bf16.msra.mxu0 %v298
    %632 = vmatprep.subr.bf16.mxu0 %v411
    %633 = vmatpush1.bf16.msra.mxu0 %v408
    %634 = vmatprep.subr.bf16.mxu0 0
    %635 = vmatpush1.bf16.msra.mxu0 0
    %636 = vmatprep.subr.bf16.mxu0 0
    %637 = vmatpush1.bf16.msra.mxu0 0
    %638 = vmatprep.subr.bf16.mxu0 0
    %639 = vmatpush1.bf16.msra.mxu0 0
    %640 = vmatprep.subr.bf16.mxu0 0
    %641 = vmatpush1.bf16.msra.mxu0 0
    %642 = vmatprep.subr.bf16.mxu0 0
    %643 = vmatpush1.bf16.msra.mxu0 0
    %644 = vmatprep.subr.bf16.mxu0 0
    %645 = vmatpush1.bf16.msra.mxu0 0
    %646 = vmatprep.subr.bf16.mxu0 0
    %647 = vmatpush1.bf16.msra.mxu0 0
    %648 = vmatprep.subr.bf16.mxu0 0
    %649 = vmatpush1.bf16.msra.mxu0 0
    %650 = vmatprep.subr.bf16.mxu0 0
    %651 = vmatpush1.bf16.msra.mxu0 0
    %652 = vmatprep.subr.bf16.mxu0 0
    %653 = vmatpush1.bf16.msra.mxu0 0
    %654 = vmatprep.subr.bf16.mxu0 0
    %655 = vmatpush1.bf16.msra.mxu0 0
    %656 = vmatprep.subr.bf16.mxu0 0
    %657 = vmatpush1.bf16.msra.mxu0 0
    %658 = vmatprep.mubr.bf16.mxu0 0
    %659 = vmatmul.mubr.bf16.gmra.mrb[0].mxu0 %v377
    %v660 = vpop.f32.mrb[0].mxu0
    %v661 = vadd.f32 %v325, %v660
    %v662 = vpop.f32.mrb[0].mxu0
    %v663 = vadd.f32 %v325, %v662
    %v664 = vpop.f32.mrb[0].mxu0
    %v665 = vadd.f32 %v330, %v664
    %v666 = vpop.f32.mrb[0].mxu0
    %v667 = vadd.f32 %v330, %v666
    %668 = vmatprep.mubr.bf16.mxu0 0
    %669 = vmatmul.mubr.bf16.gmra.mrb[0].mxu0 %v380
    %v670 = vpop.f32.mrb[0].mxu0
    %v671 = vadd.f32 %v335, %v670
    %v672 = vpop.f32.mrb[0].mxu0
    %v673 = vadd.f32 %v335, %v672
    %v674 = vpop.f32.mrb[0].mxu0
    %v675 = vadd.f32 %v340, %v674
    %v676 = vpop.f32.mrb[0].mxu0
    %v677 = vadd.f32 %v340, %v676
    %678 = vmatprep.mubr.bf16.mxu0 0
    %679 = vmatmul.mubr.bf16.gmra.mrb[0].mxu0 %v383
    %v680 = vpop.f32.mrb[0].mxu0
    %v681 = vadd.f32 %v345, %v680
    %v682 = vpop.f32.mrb[0].mxu0
    %v683 = vadd.f32 %v345, %v682
    %v684 = vpop.f32.mrb[0].mxu0
    %v685 = vadd.f32 %v350, %v684
    %v686 = vpop.f32.mrb[0].mxu0
    %v687 = vadd.f32 %v350, %v686
    %688 = vmatprep.mubr.bf16.mxu0 0
    %689 = vmatmul.mubr.bf16.gmra.mrb[0].mxu0 %v386
    %v690 = vpop.f32.mrb[0].mxu0
    %v691 = vadd.f32 %v355, %v690
    %v692 = vpop.f32.mrb[0].mxu0
    %v693 = vadd.f32 %v355, %v692
    %v694 = vpop.f32.mrb[0].mxu0
    %v695 = vpop.f32.mrb[0].mxu0
    %696 = vdwg.mxu0
    %v697 = vpack.c.bf16 %v452, %v448
    %v698 = vpack.c.bf16 %v454, %v450
    %v699 = vpack.c.bf16 %v523, %v519
    %v700 = vpack.c.bf16 %v525, %v521
    %v701 = vpack.c.bf16 %v594, %v590
    %v702 = vpack.c.bf16 %v596, %v592
    %v703 = vpack.c.bf16 %v665, %v661
    %v704 = vpack.c.bf16 %v667, %v663
    %v705 = vpack.c.bf16 %v462, %v458
    %v706 = vpack.c.bf16 %v464, %v460
    %v707 = vpack.c.bf16 %v533, %v529
    %v708 = vpack.c.bf16 %v535, %v531
    %v709 = vpack.c.bf16 %v604, %v600
    %v710 = vpack.c.bf16 %v606, %v602
    %v711 = vpack.c.bf16 %v675, %v671
    %v712 = vpack.c.bf16 %v677, %v673
    %v713 = vpack.c.bf16 %v472, %v468
    %v714 = vpack.c.bf16 %v474, %v470
    %v715 = vpack.c.bf16 %v543, %v539
    %v716 = vpack.c.bf16 %v545, %v541
    %v717 = vpack.c.bf16 %v614, %v610
    %v718 = vpack.c.bf16 %v616, %v612
    %v719 = vpack.c.bf16 %v685, %v681
    %v720 = vpack.c.bf16 %v687, %v683
    %v721 = vpack.c.bf16 %v478, %v478
    %v722 = vpack.c.bf16 %v480, %v480
    %v723 = vpack.c.bf16 %v549, %v549
    %v724 = vpack.c.bf16 %v551, %v551
    %v725 = vpack.c.bf16 %v620, %v620
    %v726 = vpack.c.bf16 %v622, %v622
    %v727 = vpack.c.bf16 %v691, %v691
    %v728 = vpack.c.bf16 %v693, %v693
    %v729 = vtanh.bf16.pop %v697
    %v730 = vtanh.bf16.pop %v698
    %v731 = vtanh.bf16.pop %v699
    %v732 = vtanh.bf16.pop %v700
    %v733 = vtanh.bf16.pop %v701
    %v734 = vtanh.bf16.pop %v702
    %v735 = vtanh.bf16.pop %v703
    %v736 = vtanh.bf16.pop %v704
    %v737 = vtanh.bf16.pop %v705
    %v738 = vtanh.bf16.pop %v706
    %v739 = vtanh.bf16.pop %v707
    %v740 = vtanh.bf16.pop %v708
    %v741 = vtanh.bf16.pop %v709
    %v742 = vtanh.bf16.pop %v710
    %v743 = vtanh.bf16.pop %v711
    %v744 = vtanh.bf16.pop %v712
    %v745 = vtanh.bf16.pop %v713
    %v746 = vtanh.bf16.pop %v714
    %v747 = vtanh.bf16.pop %v715
    %v748 = vtanh.bf16.pop %v716
    %v749 = vtanh.bf16.pop %v717
    %v750 = vtanh.bf16.pop %v718
    %v751 = vtanh.bf16.pop %v719
    %v752 = vtanh.bf16.pop %v720
    %v753 = vtanh.bf16.pop %v721
    %v754 = vtanh.bf16.pop %v722
    %v755 = vtanh.bf16.pop %v723
    %v756 = vtanh.bf16.pop %v724
    %v757 = vtanh.bf16.pop %v725
    %v758 = vtanh.bf16.pop %v726
    %v759 = vtanh.bf16.pop %v727
    %v760 = vtanh.bf16.pop %v728
    %s761 = scalar_lea.vmem %s1, 28
    %v762 = vld [vmem:[%s761] sm:$0xf]
    %v763 = vld [vmem:[%s761 + $0x4] sm:$0xf]
    %v764 = vld [vmem:[%s761 + $0x8] sm:$0xf]
    %v765 = vld [vmem:[%s761 + $0xc] sm:$0xf]
    %v766 = vld [vmem:[%s761 + $0x10] sm:$0xf]
    %v767 = vld [vmem:[%s761 + $0x14] sm:$0xf]
    %v768 = vld [vmem:[%s761 + $0x18] sm:$0x1]
    %s769 = scalar_lea.vmem %s2, 56
    %v770 = vld [vmem:[%s769] sm:$0xff]
    %v771 = vld [vmem:[%s769 + $0x8] sm:$0xff]
    %v772 = vld [vmem:[%s769 + $0x10] sm:$0xff]
    %v773 = vld [vmem:[%s769 + $0x18] sm:$0xff]
    %v774 = vld [vmem:[%s769 + $0x20] sm:$0xff]
    %v775 = vld [vmem:[%s769 + $0x28] sm:$0xff]
    %v776 = vld [vmem:[%s769 + $0x30] sm:$0x3]
    %778 = vset.pattern.permute.xlu0 0
    %779 = vperm.xlu0 %778, %v770
    %v780 = vpop.permute.xlu0 %779
    %783 = vset.pattern.permute.xlu0 0
    %784 = vperm.xlu0 %783, %v771
    %v785 = vpop.permute.xlu0 %784
    %788 = vset.pattern.permute.xlu0 0
    %789 = vperm.xlu0 %788, %v772
    %v790 = vpop.permute.xlu0 %789
    %793 = vset.pattern.permute.xlu0 0
    %794 = vperm.xlu0 %793, %v773
    %v795 = vpop.permute.xlu0 %794
    %798 = vset.pattern.permute.xlu0 0
    %799 = vperm.xlu0 %798, %v774
    %v800 = vpop.permute.xlu0 %799
    %803 = vset.pattern.permute.xlu0 0
    %804 = vperm.xlu0 %803, %v775
    %v805 = vpop.permute.xlu0 %804
    %808 = vset.pattern.permute.xlu0 0
    %809 = vperm.xlu0 %808, %v776
    %v810 = vpop.permute.xlu0 %809
    %v819 = vunpack.c.l.b16 %v762
    %v820 = vunpack.c.l.b16 %v763
    %v821 = vunpack.c.l.b16 %v764
    %v822 = vunpack.c.l.b16 %v765
    %v823 = vunpack.c.l.b16 %v766
    %v824 = vunpack.c.l.b16 %v767
    %v825 = vunpack.c.l.b16 %v768
    %v826 = vpack.c.b16 %v820, %v819
    %v827 = vpack.c.b16 %v822, %v821
    %v828 = vpack.c.b16 %v824, %v823
    %v829 = vpack.c.b16 %v825, %v825
    %v831 = vsel %vm375, %v826, 0
    %v834 = vsel %vm375, %v827, 0
    %v837 = vsel %vm375, %v828, 0
    %v840 = vsel %vm375, %v829, 0
    %v843 = vsel %vm388, %v753, 0
    %v846 = vsel %vm388, %v754, 0
    %v849 = vsel %vm388, %v755, 0
    %v852 = vsel %vm388, %v756, 0
    %v855 = vsel %vm388, %v757, 0
    %v858 = vsel %vm388, %v758, 0
    %v861 = vsel %vm388, %v759, 0
    %v864 = vsel %vm388, %v760, 0
    %866 = vmatprep.subr.bf16.mxu0 %v730
    %867 = vmatpush1.bf16.msra.mxu0 %v729
    %868 = vmatprep.subr.bf16.mxu0 %v738
    %869 = vmatpush1.bf16.msra.mxu0 %v737
    %870 = vmatprep.subr.bf16.mxu0 %v746
    %871 = vmatpush1.bf16.msra.mxu0 %v745
    %872 = vmatprep.subr.bf16.mxu0 %v846
    %873 = vmatpush1.bf16.msra.mxu0 %v843
    %874 = vmatprep.subr.bf16.mxu0 0
    %875 = vmatpush1.bf16.msra.mxu0 0
    %876 = vmatprep.subr.bf16.mxu0 0
    %877 = vmatpush1.bf16.msra.mxu0 0
    %878 = vmatprep.subr.bf16.mxu0 0
    %879 = vmatpush1.bf16.msra.mxu0 0
    %880 = vmatprep.subr.bf16.mxu0 0
    %881 = vmatpush1.bf16.msra.mxu0 0
    %882 = vmatprep.subr.bf16.mxu0 0
    %883 = vmatpush1.bf16.msra.mxu0 0
    %884 = vmatprep.subr.bf16.mxu0 0
    %885 = vmatpush1.bf16.msra.mxu0 0
    %886 = vmatprep.subr.bf16.mxu0 0
    %887 = vmatpush1.bf16.msra.mxu0 0
    %888 = vmatprep.subr.bf16.mxu0 0
    %889 = vmatpush1.bf16.msra.mxu0 0
    %890 = vmatprep.subr.bf16.mxu0 0
    %891 = vmatpush1.bf16.msra.mxu0 0
    %892 = vmatprep.subr.bf16.mxu0 0
    %893 = vmatpush1.bf16.msra.mxu0 0
    %894 = vmatprep.subr.bf16.mxu0 0
    %895 = vmatpush1.bf16.msra.mxu0 0
    %896 = vmatprep.subr.bf16.mxu0 0
    %897 = vmatpush1.bf16.msra.mxu0 0
    %898 = vmatprep.mubr.bf16.mxu0 0
    %899 = vmatmul.mubr.bf16.gmra.mrb[0].mxu0 %v831
    %v900 = vpop.f32.mrb[0].mxu0
    %v901 = vadd.f32 %v780, %v900
    %v902 = vpop.f32.mrb[0].mxu0
    %v903 = vadd.f32 %v780, %v902
    %v904 = vpop.f32.mrb[0].mxu0
    %v905 = vadd.f32 %v785, %v904
    %v906 = vpop.f32.mrb[0].mxu0
    %v907 = vadd.f32 %v785, %v906
    %908 = vmatprep.mubr.bf16.mxu0 0
    %909 = vmatmul.mubr.bf16.gmra.mrb[0].mxu0 %v834
    %v910 = vpop.f32.mrb[0].mxu0
    %v911 = vadd.f32 %v790, %v910
    %v912 = vpop.f32.mrb[0].mxu0
    %v913 = vadd.f32 %v790, %v912
    %v914 = vpop.f32.mrb[0].mxu0
    %v915 = vadd.f32 %v795, %v914
    %v916 = vpop.f32.mrb[0].mxu0
    %v917 = vadd.f32 %v795, %v916
    %918 = vmatprep.mubr.bf16.mxu0 0
    %919 = vmatmul.mubr.bf16.gmra.mrb[0].mxu0 %v837
    %v920 = vpop.f32.mrb[0].mxu0
    %v921 = vadd.f32 %v800, %v920
    %v922 = vpop.f32.mrb[0].mxu0
    %v923 = vadd.f32 %v800, %v922
    %v924 = vpop.f32.mrb[0].mxu0
    %v925 = vadd.f32 %v805, %v924
    %v926 = vpop.f32.mrb[0].mxu0
    %v927 = vadd.f32 %v805, %v926
    %928 = vmatprep.mubr.bf16.mxu0 0
    %929 = vmatmul.mubr.bf16.gmra.mrb[0].mxu0 %v840
    %v930 = vpop.f32.mrb[0].mxu0
    %v931 = vadd.f32 %v810, %v930
    %v932 = vpop.f32.mrb[0].mxu0
    %v933 = vadd.f32 %v810, %v932
    %v934 = vpop.f32.mrb[0].mxu0
    %v935 = vpop.f32.mrb[0].mxu0
    %936 = vdwg.mxu0
    %937 = vmatprep.subr.bf16.mxu0 %v732
    %938 = vmatpush1.bf16.msra.mxu0 %v731
    %939 = vmatprep.subr.bf16.mxu0 %v740
    %940 = vmatpush1.bf16.msra.mxu0 %v739
    %941 = vmatprep.subr.bf16.mxu0 %v748
    %942 = vmatpush1.bf16.msra.mxu0 %v747
    %943 = vmatprep.subr.bf16.mxu0 %v852
    %944 = vmatpush1.bf16.msra.mxu0 %v849
    %945 = vmatprep.subr.bf16.mxu0 0
    %946 = vmatpush1.bf16.msra.mxu0 0
    %947 = vmatprep.subr.bf16.mxu0 0
    %948 = vmatpush1.bf16.msra.mxu0 0
    %949 = vmatprep.subr.bf16.mxu0 0
    %950 = vmatpush1.bf16.msra.mxu0 0
    %951 = vmatprep.subr.bf16.mxu0 0
    %952 = vmatpush1.bf16.msra.mxu0 0
    %953 = vmatprep.subr.bf16.mxu0 0
    %954 = vmatpush1.bf16.msra.mxu0 0
    %955 = vmatprep.subr.bf16.mxu0 0
    %956 = vmatpush1.bf16.msra.mxu0 0
    %957 = vmatprep.subr.bf16.mxu0 0
    %958 = vmatpush1.bf16.msra.mxu0 0
    %959 = vmatprep.subr.bf16.mxu0 0
    %960 = vmatpush1.bf16.msra.mxu0 0
    %961 = vmatprep.subr.bf16.mxu0 0
    %962 = vmatpush1.bf16.msra.mxu0 0
    %963 = vmatprep.subr.bf16.mxu0 0
    %964 = vmatpush1.bf16.msra.mxu0 0
    %965 = vmatprep.subr.bf16.mxu0 0
    %966 = vmatpush1.bf16.msra.mxu0 0
    %967 = vmatprep.subr.bf16.mxu0 0
    %968 = vmatpush1.bf16.msra.mxu0 0
    %969 = vmatprep.mubr.bf16.mxu0 0
    %970 = vmatmul.mubr.bf16.gmra.mrb[0].mxu0 %v831
    %v971 = vpop.f32.mrb[0].mxu0
    %v972 = vadd.f32 %v780, %v971
    %v973 = vpop.f32.mrb[0].mxu0
    %v974 = vadd.f32 %v780, %v973
    %v975 = vpop.f32.mrb[0].mxu0
    %v976 = vadd.f32 %v785, %v975
    %v977 = vpop.f32.mrb[0].mxu0
    %v978 = vadd.f32 %v785, %v977
    %979 = vmatprep.mubr.bf16.mxu0 0
    %980 = vmatmul.mubr.bf16.gmra.mrb[0].mxu0 %v834
    %v981 = vpop.f32.mrb[0].mxu0
    %v982 = vadd.f32 %v790, %v981
    %v983 = vpop.f32.mrb[0].mxu0
    %v984 = vadd.f32 %v790, %v983
    %v985 = vpop.f32.mrb[0].mxu0
    %v986 = vadd.f32 %v795, %v985
    %v987 = vpop.f32.mrb[0].mxu0
    %v988 = vadd.f32 %v795, %v987
    %989 = vmatprep.mubr.bf16.mxu0 0
    %990 = vmatmul.mubr.bf16.gmra.mrb[0].mxu0 %v837
    %v991 = vpop.f32.mrb[0].mxu0
    %v992 = vadd.f32 %v800, %v991
    %v993 = vpop.f32.mrb[0].mxu0
    %v994 = vadd.f32 %v800, %v993
    %v995 = vpop.f32.mrb[0].mxu0
    %v996 = vadd.f32 %v805, %v995
    %v997 = vpop.f32.mrb[0].mxu0
    %v998 = vadd.f32 %v805, %v997
    %999 = vmatprep.mubr.bf16.mxu0 0
    %1000 = vmatmul.mubr.bf16.gmra.mrb[0].mxu0 %v840
    %v1001 = vpop.f32.mrb[0].mxu0
    %v1002 = vadd.f32 %v810, %v1001
    %v1003 = vpop.f32.mrb[0].mxu0
    %v1004 = vadd.f32 %v810, %v1003
    %v1005 = vpop.f32.mrb[0].mxu0
    %v1006 = vpop.f32.mrb[0].mxu0
    %1007 = vdwg.mxu0
    %1008 = vmatprep.subr.bf16.mxu0 %v734
    %1009 = vmatpush1.bf16.msra.mxu0 %v733
    %1010 = vmatprep.subr.bf16.mxu0 %v742
    %1011 = vmatpush1.bf16.msra.mxu0 %v741
    %1012 = vmatprep.subr.bf16.mxu0 %v750
    %1013 = vmatpush1.bf16.msra.mxu0 %v749
    %1014 = vmatprep.subr.bf16.mxu0 %v858
    %1015 = vmatpush1.bf16.msra.mxu0 %v855
    %1016 = vmatprep.subr.bf16.mxu0 0
    %1017 = vmatpush1.bf16.msra.mxu0 0
    %1018 = vmatprep.subr.bf16.mxu0 0
    %1019 = vmatpush1.bf16.msra.mxu0 0
    %1020 = vmatprep.subr.bf16.mxu0 0
    %1021 = vmatpush1.bf16.msra.mxu0 0
    %1022 = vmatprep.subr.bf16.mxu0 0
    %1023 = vmatpush1.bf16.msra.mxu0 0
    %1024 = vmatprep.subr.bf16.mxu0 0
    %1025 = vmatpush1.bf16.msra.mxu0 0
    %1026 = vmatprep.subr.bf16.mxu0 0
    %1027 = vmatpush1.bf16.msra.mxu0 0
    %1028 = vmatprep.subr.bf16.mxu0 0
    %1029 = vmatpush1.bf16.msra.mxu0 0
    %1030 = vmatprep.subr.bf16.mxu0 0
    %1031 = vmatpush1.bf16.msra.mxu0 0
    %1032 = vmatprep.subr.bf16.mxu0 0
    %1033 = vmatpush1.bf16.msra.mxu0 0
    %1034 = vmatprep.subr.bf16.mxu0 0
    %1035 = vmatpush1.bf16.msra.mxu0 0
    %1036 = vmatprep.subr.bf16.mxu0 0
    %1037 = vmatpush1.bf16.msra.mxu0 0
    %1038 = vmatprep.subr.bf16.mxu0 0
    %1039 = vmatpush1.bf16.msra.mxu0 0
    %1040 = vmatprep.mubr.bf16.mxu0 0
    %1041 = vmatmul.mubr.bf16.gmra.mrb[0].mxu0 %v831
    %v1042 = vpop.f32.mrb[0].mxu0
    %v1043 = vadd.f32 %v780, %v1042
    %v1044 = vpop.f32.mrb[0].mxu0
    %v1045 = vadd.f32 %v780, %v1044
    %v1046 = vpop.f32.mrb[0].mxu0
    %v1047 = vadd.f32 %v785, %v1046
    %v1048 = vpop.f32.mrb[0].mxu0
    %v1049 = vadd.f32 %v785, %v1048
    %1050 = vmatprep.mubr.bf16.mxu0 0
    %1051 = vmatmul.mubr.bf16.gmra.mrb[0].mxu0 %v834
    %v1052 = vpop.f32.mrb[0].mxu0
    %v1053 = vadd.f32 %v790, %v1052
    %v1054 = vpop.f32.mrb[0].mxu0
    %v1055 = vadd.f32 %v790, %v1054
    %v1056 = vpop.f32.mrb[0].mxu0
    %v1057 = vadd.f32 %v795, %v1056
    %v1058 = vpop.f32.mrb[0].mxu0
    %v1059 = vadd.f32 %v795, %v1058
    %1060 = vmatprep.mubr.bf16.mxu0 0
    %1061 = vmatmul.mubr.bf16.gmra.mrb[0].mxu0 %v837
    %v1062 = vpop.f32.mrb[0].mxu0
    %v1063 = vadd.f32 %v800, %v1062
    %v1064 = vpop.f32.mrb[0].mxu0
    %v1065 = vadd.f32 %v800, %v1064
    %v1066 = vpop.f32.mrb[0].mxu0
    %v1067 = vadd.f32 %v805, %v1066
    %v1068 = vpop.f32.mrb[0].mxu0
    %v1069 = vadd.f32 %v805, %v1068
    %1070 = vmatprep.mubr.bf16.mxu0 0
    %1071 = vmatmul.mubr.bf16.gmra.mrb[0].mxu0 %v840
    %v1072 = vpop.f32.mrb[0].mxu0
    %v1073 = vadd.f32 %v810, %v1072
    %v1074 = vpop.f32.mrb[0].mxu0
    %v1075 = vadd.f32 %v810, %v1074
    %v1076 = vpop.f32.mrb[0].mxu0
    %v1077 = vpop.f32.mrb[0].mxu0
    %1078 = vdwg.mxu0
    %1079 = vmatprep.subr.bf16.mxu0 %v736
    %1080 = vmatpush1.bf16.msra.mxu0 %v735
    %1081 = vmatprep.subr.bf16.mxu0 %v744
    %1082 = vmatpush1.bf16.msra.mxu0 %v743
    %1083 = vmatprep.subr.bf16.mxu0 %v752
    %1084 = vmatpush1.bf16.msra.mxu0 %v751
    %1085 = vmatprep.subr.bf16.mxu0 %v864
    %1086 = vmatpush1.bf16.msra.mxu0 %v861
    %1087 = vmatprep.subr.bf16.mxu0 0
    %1088 = vmatpush1.bf16.msra.mxu0 0
    %1089 = vmatprep.subr.bf16.mxu0 0
    %1090 = vmatpush1.bf16.msra.mxu0 0
    %1091 = vmatprep.subr.bf16.mxu0 0
    %1092 = vmatpush1.bf16.msra.mxu0 0
    %1093 = vmatprep.subr.bf16.mxu0 0
    %1094 = vmatpush1.bf16.msra.mxu0 0
    %1095 = vmatprep.subr.bf16.mxu0 0
    %1096 = vmatpush1.bf16.msra.mxu0 0
    %1097 = vmatprep.subr.bf16.mxu0 0
    %1098 = vmatpush1.bf16.msra.mxu0 0
    %1099 = vmatprep.subr.bf16.mxu0 0
    %1100 = vmatpush1.bf16.msra.mxu0 0
    %1101 = vmatprep.subr.bf16.mxu0 0
    %1102 = vmatpush1.bf16.msra.mxu0 0
    %1103 = vmatprep.subr.bf16.mxu0 0
    %1104 = vmatpush1.bf16.msra.mxu0 0
    %1105 = vmatprep.subr.bf16.mxu0 0
    %1106 = vmatpush1.bf16.msra.mxu0 0
    %1107 = vmatprep.subr.bf16.mxu0 0
    %1108 = vmatpush1.bf16.msra.mxu0 0
    %1109 = vmatprep.subr.bf16.mxu0 0
    %1110 = vmatpush1.bf16.msra.mxu0 0
    %1111 = vmatprep.mubr.bf16.mxu0 0
    %1112 = vmatmul.mubr.bf16.gmra.mrb[0].mxu0 %v831
    %v1113 = vpop.f32.mrb[0].mxu0
    %v1114 = vadd.f32 %v780, %v1113
    %v1115 = vpop.f32.mrb[0].mxu0
    %v1116 = vadd.f32 %v780, %v1115
    %v1117 = vpop.f32.mrb[0].mxu0
    %v1118 = vadd.f32 %v785, %v1117
    %v1119 = vpop.f32.mrb[0].mxu0
    %v1120 = vadd.f32 %v785, %v1119
    %1121 = vmatprep.mubr.bf16.mxu0 0
    %1122 = vmatmul.mubr.bf16.gmra.mrb[0].mxu0 %v834
    %v1123 = vpop.f32.mrb[0].mxu0
    %v1124 = vadd.f32 %v790, %v1123
    %v1125 = vpop.f32.mrb[0].mxu0
    %v1126 = vadd.f32 %v790, %v1125
    %v1127 = vpop.f32.mrb[0].mxu0
    %v1128 = vadd.f32 %v795, %v1127
    %v1129 = vpop.f32.mrb[0].mxu0
    %v1130 = vadd.f32 %v795, %v1129
    %1131 = vmatprep.mubr.bf16.mxu0 0
    %1132 = vmatmul.mubr.bf16.gmra.mrb[0].mxu0 %v837
    %v1133 = vpop.f32.mrb[0].mxu0
    %v1134 = vadd.f32 %v800, %v1133
    %v1135 = vpop.f32.mrb[0].mxu0
    %v1136 = vadd.f32 %v800, %v1135
    %v1137 = vpop.f32.mrb[0].mxu0
    %v1138 = vadd.f32 %v805, %v1137
    %v1139 = vpop.f32.mrb[0].mxu0
    %v1140 = vadd.f32 %v805, %v1139
    %1141 = vmatprep.mubr.bf16.mxu0 0
    %1142 = vmatmul.mubr.bf16.gmra.mrb[0].mxu0 %v840
    %v1143 = vpop.f32.mrb[0].mxu0
    %v1144 = vadd.f32 %v810, %v1143
    %v1145 = vpop.f32.mrb[0].mxu0
    %v1146 = vadd.f32 %v810, %v1145
    %v1147 = vpop.f32.mrb[0].mxu0
    %v1148 = vpop.f32.mrb[0].mxu0
    %1149 = vdwg.mxu0
    %v1150 = vpack.c.bf16 %v905, %v901
    %v1151 = vpack.c.bf16 %v907, %v903
    %v1152 = vpack.c.bf16 %v976, %v972
    %v1153 = vpack.c.bf16 %v978, %v974
    %v1154 = vpack.c.bf16 %v1047, %v1043
    %v1155 = vpack.c.bf16 %v1049, %v1045
    %v1156 = vpack.c.bf16 %v1118, %v1114
    %v1157 = vpack.c.bf16 %v1120, %v1116
    %v1158 = vpack.c.bf16 %v915, %v911
    %v1159 = vpack.c.bf16 %v917, %v913
    %v1160 = vpack.c.bf16 %v986, %v982
    %v1161 = vpack.c.bf16 %v988, %v984
    %v1162 = vpack.c.bf16 %v1057, %v1053
    %v1163 = vpack.c.bf16 %v1059, %v1055
    %v1164 = vpack.c.bf16 %v1128, %v1124
    %v1165 = vpack.c.bf16 %v1130, %v1126
    %v1166 = vpack.c.bf16 %v925, %v921
    %v1167 = vpack.c.bf16 %v927, %v923
    %v1168 = vpack.c.bf16 %v996, %v992
    %v1169 = vpack.c.bf16 %v998, %v994
    %v1170 = vpack.c.bf16 %v1067, %v1063
    %v1171 = vpack.c.bf16 %v1069, %v1065
    %v1172 = vpack.c.bf16 %v1138, %v1134
    %v1173 = vpack.c.bf16 %v1140, %v1136
    %v1174 = vpack.c.bf16 %v931, %v931
    %v1175 = vpack.c.bf16 %v933, %v933
    %v1176 = vpack.c.bf16 %v1002, %v1002
    %v1177 = vpack.c.bf16 %v1004, %v1004
    %v1178 = vpack.c.bf16 %v1073, %v1073
    %v1179 = vpack.c.bf16 %v1075, %v1075
    %v1180 = vpack.c.bf16 %v1144, %v1144
    %v1181 = vpack.c.bf16 %v1146, %v1146
    %v1182 = vtanh.bf16.pop %v1150
    %v1183 = vtanh.bf16.pop %v1151
    %v1184 = vtanh.bf16.pop %v1152
    %v1185 = vtanh.bf16.pop %v1153
    %v1186 = vtanh.bf16.pop %v1154
    %v1187 = vtanh.bf16.pop %v1155
    %v1188 = vtanh.bf16.pop %v1156
    %v1189 = vtanh.bf16.pop %v1157
    %v1190 = vtanh.bf16.pop %v1158
    %v1191 = vtanh.bf16.pop %v1159
    %v1192 = vtanh.bf16.pop %v1160
    %v1193 = vtanh.bf16.pop %v1161
    %v1194 = vtanh.bf16.pop %v1162
    %v1195 = vtanh.bf16.pop %v1163
    %v1196 = vtanh.bf16.pop %v1164
    %v1197 = vtanh.bf16.pop %v1165
    %v1198 = vtanh.bf16.pop %v1166
    %v1199 = vtanh.bf16.pop %v1167
    %v1200 = vtanh.bf16.pop %v1168
    %v1201 = vtanh.bf16.pop %v1169
    %v1202 = vtanh.bf16.pop %v1170
    %v1203 = vtanh.bf16.pop %v1171
    %v1204 = vtanh.bf16.pop %v1172
    %v1205 = vtanh.bf16.pop %v1173
    %v1206 = vtanh.bf16.pop %v1174
    %v1207 = vtanh.bf16.pop %v1175
    %v1208 = vtanh.bf16.pop %v1176
    %v1209 = vtanh.bf16.pop %v1177
    %v1210 = vtanh.bf16.pop %v1178
    %v1211 = vtanh.bf16.pop %v1179
    %v1212 = vtanh.bf16.pop %v1180
    %v1213 = vtanh.bf16.pop %v1181
    %s1214 = scalar_lea.vmem %s1, 56
    %v1215 = vld [vmem:[%s1214] sm:$0xf]
    %v1216 = vld [vmem:[%s1214 + $0x4] sm:$0xf]
    %v1217 = vld [vmem:[%s1214 + $0x8] sm:$0xf]
    %v1218 = vld [vmem:[%s1214 + $0xc] sm:$0xf]
    %v1219 = vld [vmem:[%s1214 + $0x10] sm:$0xf]
    %v1220 = vld [vmem:[%s1214 + $0x14] sm:$0xf]
    %v1221 = vld [vmem:[%s1214 + $0x18] sm:$0x1]
    %s1222 = scalar_lea.vmem %s2, 112
    %v1223 = vld [vmem:[%s1222] sm:$0xff]
    %v1224 = vld [vmem:[%s1222 + $0x8] sm:$0xff]
    %v1225 = vld [vmem:[%s1222 + $0x10] sm:$0xff]
    %v1226 = vld [vmem:[%s1222 + $0x18] sm:$0xff]
    %v1227 = vld [vmem:[%s1222 + $0x20] sm:$0xff]
    %v1228 = vld [vmem:[%s1222 + $0x28] sm:$0xff]
    %v1229 = vld [vmem:[%s1222 + $0x30] sm:$0x3]
    %1231 = vset.pattern.permute.xlu0 0
    %1232 = vperm.xlu0 %1231, %v1223
    %v1233 = vpop.permute.xlu0 %1232
    %1236 = vset.pattern.permute.xlu0 0
    %1237 = vperm.xlu0 %1236, %v1224
    %v1238 = vpop.permute.xlu0 %1237
    %1241 = vset.pattern.permute.xlu0 0
    %1242 = vperm.xlu0 %1241, %v1225
    %v1243 = vpop.permute.xlu0 %1242
    %1246 = vset.pattern.permute.xlu0 0
    %1247 = vperm.xlu0 %1246, %v1226
    %v1248 = vpop.permute.xlu0 %1247
    %1251 = vset.pattern.permute.xlu0 0
    %1252 = vperm.xlu0 %1251, %v1227
    %v1253 = vpop.permute.xlu0 %1252
    %1256 = vset.pattern.permute.xlu0 0
    %1257 = vperm.xlu0 %1256, %v1228
    %v1258 = vpop.permute.xlu0 %1257
    %1261 = vset.pattern.permute.xlu0 0
    %1262 = vperm.xlu0 %1261, %v1229
    %v1263 = vpop.permute.xlu0 %1262
    %v1272 = vunpack.c.l.b16 %v1215
    %v1273 = vunpack.c.l.b16 %v1216
    %v1274 = vunpack.c.l.b16 %v1217
    %v1275 = vunpack.c.l.b16 %v1218
    %v1276 = vunpack.c.l.b16 %v1219
    %v1277 = vunpack.c.l.b16 %v1220
    %v1278 = vunpack.c.l.b16 %v1221
    %v1279 = vpack.c.b16 %v1273, %v1272
    %v1280 = vpack.c.b16 %v1275, %v1274
    %v1281 = vpack.c.b16 %v1277, %v1276
    %v1282 = vpack.c.b16 %v1278, %v1278
    %v1284 = vsel %vm375, %v1279, 0
    %v1287 = vsel %vm375, %v1280, 0
    %v1290 = vsel %vm375, %v1281, 0
    %v1293 = vsel %vm375, %v1282, 0
    %v1296 = vsel %vm388, %v1206, 0
    %v1299 = vsel %vm388, %v1207, 0
    %v1302 = vsel %vm388, %v1208, 0
    %v1305 = vsel %vm388, %v1209, 0
    %v1308 = vsel %vm388, %v1210, 0
    %v1311 = vsel %vm388, %v1211, 0
    %v1314 = vsel %vm388, %v1212, 0
    %v1317 = vsel %vm388, %v1213, 0
    %1319 = vmatprep.subr.bf16.mxu0 %v1183
    %1320 = vmatpush1.bf16.msra.mxu0 %v1182
    %1321 = vmatprep.subr.bf16.mxu0 %v1191
    %1322 = vmatpush1.bf16.msra.mxu0 %v1190
    %1323 = vmatprep.subr.bf16.mxu0 %v1199
    %1324 = vmatpush1.bf16.msra.mxu0 %v1198
    %1325 = vmatprep.subr.bf16.mxu0 %v1299
    %1326 = vmatpush1.bf16.msra.mxu0 %v1296
    %1327 = vmatprep.subr.bf16.mxu0 0
    %1328 = vmatpush1.bf16.msra.mxu0 0
    %1329 = vmatprep.subr.bf16.mxu0 0
    %1330 = vmatpush1.bf16.msra.mxu0 0
    %1331 = vmatprep.subr.bf16.mxu0 0
    %1332 = vmatpush1.bf16.msra.mxu0 0
    %1333 = vmatprep.subr.bf16.mxu0 0
    %1334 = vmatpush1.bf16.msra.mxu0 0
    %1335 = vmatprep.subr.bf16.mxu0 0
    %1336 = vmatpush1.bf16.msra.mxu0 0
    %1337 = vmatprep.subr.bf16.mxu0 0
    %1338 = vmatpush1.bf16.msra.mxu0 0
    %1339 = vmatprep.subr.bf16.mxu0 0
    %1340 = vmatpush1.bf16.msra.mxu0 0
    %1341 = vmatprep.subr.bf16.mxu0 0
    %1342 = vmatpush1.bf16.msra.mxu0 0
    %1343 = vmatprep.subr.bf16.mxu0 0
    %1344 = vmatpush1.bf16.msra.mxu0 0
    %1345 = vmatprep.subr.bf16.mxu0 0
    %1346 = vmatpush1.bf16.msra.mxu0 0
    %1347 = vmatprep.subr.bf16.mxu0 0
    %1348 = vmatpush1.bf16.msra.mxu0 0
    %1349 = vmatprep.subr.bf16.mxu0 0
    %1350 = vmatpush1.bf16.msra.mxu0 0
    %1351 = vmatprep.mubr.bf16.mxu0 0
    %1352 = vmatmul.mubr.bf16.gmra.mrb[0].mxu0 %v1284
    %v1353 = vpop.f32.mrb[0].mxu0
    %v1354 = vadd.f32 %v1233, %v1353
    %v1355 = vpop.f32.mrb[0].mxu0
    %v1356 = vadd.f32 %v1233, %v1355
    %v1357 = vpop.f32.mrb[0].mxu0
    %v1358 = vadd.f32 %v1238, %v1357
    %v1359 = vpop.f32.mrb[0].mxu0
    %v1360 = vadd.f32 %v1238, %v1359
    %1361 = vmatprep.mubr.bf16.mxu0 0
    %1362 = vmatmul.mubr.bf16.gmra.mrb[0].mxu0 %v1287
    %v1363 = vpop.f32.mrb[0].mxu0
    %v1364 = vadd.f32 %v1243, %v1363
    %v1365 = vpop.f32.mrb[0].mxu0
    %v1366 = vadd.f32 %v1243, %v1365
    %v1367 = vpop.f32.mrb[0].mxu0
    %v1368 = vadd.f32 %v1248, %v1367
    %v1369 = vpop.f32.mrb[0].mxu0
    %v1370 = vadd.f32 %v1248, %v1369
    %1371 = vmatprep.mubr.bf16.mxu0 0
    %1372 = vmatmul.mubr.bf16.gmra.mrb[0].mxu0 %v1290
    %v1373 = vpop.f32.mrb[0].mxu0
    %v1374 = vadd.f32 %v1253, %v1373
    %v1375 = vpop.f32.mrb[0].mxu0
    %v1376 = vadd.f32 %v1253, %v1375
    %v1377 = vpop.f32.mrb[0].mxu0
    %v1378 = vadd.f32 %v1258, %v1377
    %v1379 = vpop.f32.mrb[0].mxu0
    %v1380 = vadd.f32 %v1258, %v1379
    %1381 = vmatprep.mubr.bf16.mxu0 0
    %1382 = vmatmul.mubr.bf16.gmra.mrb[0].mxu0 %v1293
    %v1383 = vpop.f32.mrb[0].mxu0
    %v1384 = vadd.f32 %v1263, %v1383
    %v1385 = vpop.f32.mrb[0].mxu0
    %v1386 = vadd.f32 %v1263, %v1385
    %v1387 = vpop.f32.mrb[0].mxu0
    %v1388 = vpop.f32.mrb[0].mxu0
    %1389 = vdwg.mxu0
    %1390 = vmatprep.subr.bf16.mxu0 %v1185
    %1391 = vmatpush1.bf16.msra.mxu0 %v1184
    %1392 = vmatprep.subr.bf16.mxu0 %v1193
    %1393 = vmatpush1.bf16.msra.mxu0 %v1192
    %1394 = vmatprep.subr.bf16.mxu0 %v1201
    %1395 = vmatpush1.bf16.msra.mxu0 %v1200
    %1396 = vmatprep.subr.bf16.mxu0 %v1305
    %1397 = vmatpush1.bf16.msra.mxu0 %v1302
    %1398 = vmatprep.subr.bf16.mxu0 0
    %1399 = vmatpush1.bf16.msra.mxu0 0
    %1400 = vmatprep.subr.bf16.mxu0 0
    %1401 = vmatpush1.bf16.msra.mxu0 0
    %1402 = vmatprep.subr.bf16.mxu0 0
    %1403 = vmatpush1.bf16.msra.mxu0 0
    %1404 = vmatprep.subr.bf16.mxu0 0
    %1405 = vmatpush1.bf16.msra.mxu0 0
    %1406 = vmatprep.subr.bf16.mxu0 0
    %1407 = vmatpush1.bf16.msra.mxu0 0
    %1408 = vmatprep.subr.bf16.mxu0 0
    %1409 = vmatpush1.bf16.msra.mxu0 0
    %1410 = vmatprep.subr.bf16.mxu0 0
    %1411 = vmatpush1.bf16.msra.mxu0 0
    %1412 = vmatprep.subr.bf16.mxu0 0
    %1413 = vmatpush1.bf16.msra.mxu0 0
    %1414 = vmatprep.subr.bf16.mxu0 0
    %1415 = vmatpush1.bf16.msra.mxu0 0
    %1416 = vmatprep.subr.bf16.mxu0 0
    %1417 = vmatpush1.bf16.msra.mxu0 0
    %1418 = vmatprep.subr.bf16.mxu0 0
    %1419 = vmatpush1.bf16.msra.mxu0 0
    %1420 = vmatprep.subr.bf16.mxu0 0
    %1421 = vmatpush1.bf16.msra.mxu0 0
    %1422 = vmatprep.mubr.bf16.mxu0 0
    %1423 = vmatmul.mubr.bf16.gmra.mrb[0].mxu0 %v1284
    %v1424 = vpop.f32.mrb[0].mxu0
    %v1425 = vadd.f32 %v1233, %v1424
    %v1426 = vpop.f32.mrb[0].mxu0
    %v1427 = vadd.f32 %v1233, %v1426
    %v1428 = vpop.f32.mrb[0].mxu0
    %v1429 = vadd.f32 %v1238, %v1428
    %v1430 = vpop.f32.mrb[0].mxu0
    %v1431 = vadd.f32 %v1238, %v1430
    %1432 = vmatprep.mubr.bf16.mxu0 0
    %1433 = vmatmul.mubr.bf16.gmra.mrb[0].mxu0 %v1287
    %v1434 = vpop.f32.mrb[0].mxu0
    %v1435 = vadd.f32 %v1243, %v1434
    %v1436 = vpop.f32.mrb[0].mxu0
    %v1437 = vadd.f32 %v1243, %v1436
    %v1438 = vpop.f32.mrb[0].mxu0
    %v1439 = vadd.f32 %v1248, %v1438
    %v1440 = vpop.f32.mrb[0].mxu0
    %v1441 = vadd.f32 %v1248, %v1440
    %1442 = vmatprep.mubr.bf16.mxu0 0
    %1443 = vmatmul.mubr.bf16.gmra.mrb[0].mxu0 %v1290
    %v1444 = vpop.f32.mrb[0].mxu0
    %v1445 = vadd.f32 %v1253, %v1444
    %v1446 = vpop.f32.mrb[0].mxu0
    %v1447 = vadd.f32 %v1253, %v1446
    %v1448 = vpop.f32.mrb[0].mxu0
    %v1449 = vadd.f32 %v1258, %v1448
    %v1450 = vpop.f32.mrb[0].mxu0
    %v1451 = vadd.f32 %v1258, %v1450
    %1452 = vmatprep.mubr.bf16.mxu0 0
    %1453 = vmatmul.mubr.bf16.gmra.mrb[0].mxu0 %v1293
    %v1454 = vpop.f32.mrb[0].mxu0
    %v1455 = vadd.f32 %v1263, %v1454
    %v1456 = vpop.f32.mrb[0].mxu0
    %v1457 = vadd.f32 %v1263, %v1456
    %v1458 = vpop.f32.mrb[0].mxu0
    %v1459 = vpop.f32.mrb[0].mxu0
    %1460 = vdwg.mxu0
    %1461 = vmatprep.subr.bf16.mxu0 %v1187
    %1462 = vmatpush1.bf16.msra.mxu0 %v1186
    %1463 = vmatprep.subr.bf16.mxu0 %v1195
    %1464 = vmatpush1.bf16.msra.mxu0 %v1194
    %1465 = vmatprep.subr.bf16.mxu0 %v1203
    %1466 = vmatpush1.bf16.msra.mxu0 %v1202
    %1467 = vmatprep.subr.bf16.mxu0 %v1311
    %1468 = vmatpush1.bf16.msra.mxu0 %v1308
    %1469 = vmatprep.subr.bf16.mxu0 0
    %1470 = vmatpush1.bf16.msra.mxu0 0
    %1471 = vmatprep.subr.bf16.mxu0 0
    %1472 = vmatpush1.bf16.msra.mxu0 0
    %1473 = vmatprep.subr.bf16.mxu0 0
    %1474 = vmatpush1.bf16.msra.mxu0 0
    %1475 = vmatprep.subr.bf16.mxu0 0
    %1476 = vmatpush1.bf16.msra.mxu0 0
    %1477 = vmatprep.subr.bf16.mxu0 0
    %1478 = vmatpush1.bf16.msra.mxu0 0
    %1479 = vmatprep.subr.bf16.mxu0 0
    %1480 = vmatpush1.bf16.msra.mxu0 0
    %1481 = vmatprep.subr.bf16.mxu0 0
    %1482 = vmatpush1.bf16.msra.mxu0 0
    %1483 = vmatprep.subr.bf16.mxu0 0
    %1484 = vmatpush1.bf16.msra.mxu0 0
    %1485 = vmatprep.subr.bf16.mxu0 0
    %1486 = vmatpush1.bf16.msra.mxu0 0
    %1487 = vmatprep.subr.bf16.mxu0 0
    %1488 = vmatpush1.bf16.msra.mxu0 0
    %1489 = vmatprep.subr.bf16.mxu0 0
    %1490 = vmatpush1.bf16.msra.mxu0 0
    %1491 = vmatprep.subr.bf16.mxu0 0
    %1492 = vmatpush1.bf16.msra.mxu0 0
    %1493 = vmatprep.mubr.bf16.mxu0 0
    %1494 = vmatmul.mubr.bf16.gmra.mrb[0].mxu0 %v1284
    %v1495 = vpop.f32.mrb[0].mxu0
    %v1496 = vadd.f32 %v1233, %v1495
    %v1497 = vpop.f32.mrb[0].mxu0
    %v1498 = vadd.f32 %v1233, %v1497
    %v1499 = vpop.f32.mrb[0].mxu0
    %v1500 = vadd.f32 %v1238, %v1499
    %v1501 = vpop.f32.mrb[0].mxu0
    %v1502 = vadd.f32 %v1238, %v1501
    %1503 = vmatprep.mubr.bf16.mxu0 0
    %1504 = vmatmul.mubr.bf16.gmra.mrb[0].mxu0 %v1287
    %v1505 = vpop.f32.mrb[0].mxu0
    %v1506 = vadd.f32 %v1243, %v1505
    %v1507 = vpop.f32.mrb[0].mxu0
    %v1508 = vadd.f32 %v1243, %v1507
    %v1509 = vpop.f32.mrb[0].mxu0
    %v1510 = vadd.f32 %v1248, %v1509
    %v1511 = vpop.f32.mrb[0].mxu0
    %v1512 = vadd.f32 %v1248, %v1511
    %1513 = vmatprep.mubr.bf16.mxu0 0
    %1514 = vmatmul.mubr.bf16.gmra.mrb[0].mxu0 %v1290
    %v1515 = vpop.f32.mrb[0].mxu0
    %v1516 = vadd.f32 %v1253, %v1515
    %v1517 = vpop.f32.mrb[0].mxu0
    %v1518 = vadd.f32 %v1253, %v1517
    %v1519 = vpop.f32.mrb[0].mxu0
    %v1520 = vadd.f32 %v1258, %v1519
    %v1521 = vpop.f32.mrb[0].mxu0
    %v1522 = vadd.f32 %v1258, %v1521
    %1523 = vmatprep.mubr.bf16.mxu0 0
    %1524 = vmatmul.mubr.bf16.gmra.mrb[0].mxu0 %v1293
    %v1525 = vpop.f32.mrb[0].mxu0
    %v1526 = vadd.f32 %v1263, %v1525
    %v1527 = vpop.f32.mrb[0].mxu0
    %v1528 = vadd.f32 %v1263, %v1527
    %v1529 = vpop.f32.mrb[0].mxu0
    %v1530 = vpop.f32.mrb[0].mxu0
    %1531 = vdwg.mxu0
    %1532 = vmatprep.subr.bf16.mxu0 %v1189
    %1533 = vmatpush1.bf16.msra.mxu0 %v1188
    %1534 = vmatprep.subr.bf16.mxu0 %v1197
    %1535 = vmatpush1.bf16.msra.mxu0 %v1196
    %1536 = vmatprep.subr.bf16.mxu0 %v1205
    %1537 = vmatpush1.bf16.msra.mxu0 %v1204
    %1538 = vmatprep.subr.bf16.mxu0 %v1317
    %1539 = vmatpush1.bf16.msra.mxu0 %v1314
    %1540 = vmatprep.subr.bf16.mxu0 0
    %1541 = vmatpush1.bf16.msra.mxu0 0
    %1542 = vmatprep.subr.bf16.mxu0 0
    %1543 = vmatpush1.bf16.msra.mxu0 0
    %1544 = vmatprep.subr.bf16.mxu0 0
    %1545 = vmatpush1.bf16.msra.mxu0 0
    %1546 = vmatprep.subr.bf16.mxu0 0
    %1547 = vmatpush1.bf16.msra.mxu0 0
    %1548 = vmatprep.subr.bf16.mxu0 0
    %1549 = vmatpush1.bf16.msra.mxu0 0
    %1550 = vmatprep.subr.bf16.mxu0 0
    %1551 = vmatpush1.bf16.msra.mxu0 0
    %1552 = vmatprep.subr.bf16.mxu0 0
    %1553 = vmatpush1.bf16.msra.mxu0 0
    %1554 = vmatprep.subr.bf16.mxu0 0
    %1555 = vmatpush1.bf16.msra.mxu0 0
    %1556 = vmatprep.subr.bf16.mxu0 0
    %1557 = vmatpush1.bf16.msra.mxu0 0
    %1558 = vmatprep.subr.bf16.mxu0 0
    %1559 = vmatpush1.bf16.msra.mxu0 0
    %1560 = vmatprep.subr.bf16.mxu0 0
    %1561 = vmatpush1.bf16.msra.mxu0 0
    %1562 = vmatprep.subr.bf16.mxu0 0
    %1563 = vmatpush1.bf16.msra.mxu0 0
    %1564 = vmatprep.mubr.bf16.mxu0 0
    %1565 = vmatmul.mubr.bf16.gmra.mrb[0].mxu0 %v1284
    %v1566 = vpop.f32.mrb[0].mxu0
    %v1567 = vadd.f32 %v1233, %v1566
    %v1568 = vpop.f32.mrb[0].mxu0
    %v1569 = vadd.f32 %v1233, %v1568
    %v1570 = vpop.f32.mrb[0].mxu0
    %v1571 = vadd.f32 %v1238, %v1570
    %v1572 = vpop.f32.mrb[0].mxu0
    %v1573 = vadd.f32 %v1238, %v1572
    %1574 = vmatprep.mubr.bf16.mxu0 0
    %1575 = vmatmul.mubr.bf16.gmra.mrb[0].mxu0 %v1287
    %v1576 = vpop.f32.mrb[0].mxu0
    %v1577 = vadd.f32 %v1243, %v1576
    %v1578 = vpop.f32.mrb[0].mxu0
    %v1579 = vadd.f32 %v1243, %v1578
    %v1580 = vpop.f32.mrb[0].mxu0
    %v1581 = vadd.f32 %v1248, %v1580
    %v1582 = vpop.f32.mrb[0].mxu0
    %v1583 = vadd.f32 %v1248, %v1582
    %1584 = vmatprep.mubr.bf16.mxu0 0
    %1585 = vmatmul.mubr.bf16.gmra.mrb[0].mxu0 %v1290
    %v1586 = vpop.f32.mrb[0].mxu0
    %v1587 = vadd.f32 %v1253, %v1586
    %v1588 = vpop.f32.mrb[0].mxu0
    %v1589 = vadd.f32 %v1253, %v1588
    %v1590 = vpop.f32.mrb[0].mxu0
    %v1591 = vadd.f32 %v1258, %v1590
    %v1592 = vpop.f32.mrb[0].mxu0
    %v1593 = vadd.f32 %v1258, %v1592
    %1594 = vmatprep.mubr.bf16.mxu0 0
    %1595 = vmatmul.mubr.bf16.gmra.mrb[0].mxu0 %v1293
    %v1596 = vpop.f32.mrb[0].mxu0
    %v1597 = vadd.f32 %v1263, %v1596
    %v1598 = vpop.f32.mrb[0].mxu0
    %v1599 = vadd.f32 %v1263, %v1598
    %v1600 = vpop.f32.mrb[0].mxu0
    %v1601 = vpop.f32.mrb[0].mxu0
    %1602 = vdwg.mxu0
    %v1603 = vpack.c.bf16 %v1358, %v1354
    %v1604 = vpack.c.bf16 %v1360, %v1356
    %v1605 = vpack.c.bf16 %v1429, %v1425
    %v1606 = vpack.c.bf16 %v1431, %v1427
    %v1607 = vpack.c.bf16 %v1500, %v1496
    %v1608 = vpack.c.bf16 %v1502, %v1498
    %v1609 = vpack.c.bf16 %v1571, %v1567
    %v1610 = vpack.c.bf16 %v1573, %v1569
    %v1611 = vpack.c.bf16 %v1368, %v1364
    %v1612 = vpack.c.bf16 %v1370, %v1366
    %v1613 = vpack.c.bf16 %v1439, %v1435
    %v1614 = vpack.c.bf16 %v1441, %v1437
    %v1615 = vpack.c.bf16 %v1510, %v1506
    %v1616 = vpack.c.bf16 %v1512, %v1508
    %v1617 = vpack.c.bf16 %v1581, %v1577
    %v1618 = vpack.c.bf16 %v1583, %v1579
    %v1619 = vpack.c.bf16 %v1378, %v1374
    %v1620 = vpack.c.bf16 %v1380, %v1376
    %v1621 = vpack.c.bf16 %v1449, %v1445
    %v1622 = vpack.c.bf16 %v1451, %v1447
    %v1623 = vpack.c.bf16 %v1520, %v1516
    %v1624 = vpack.c.bf16 %v1522, %v1518
    %v1625 = vpack.c.bf16 %v1591, %v1587
    %v1626 = vpack.c.bf16 %v1593, %v1589
    %v1627 = vpack.c.bf16 %v1384, %v1384
    %v1628 = vpack.c.bf16 %v1386, %v1386
    %v1629 = vpack.c.bf16 %v1455, %v1455
    %v1630 = vpack.c.bf16 %v1457, %v1457
    %v1631 = vpack.c.bf16 %v1526, %v1526
    %v1632 = vpack.c.bf16 %v1528, %v1528
    %v1633 = vpack.c.bf16 %v1597, %v1597
    %v1634 = vpack.c.bf16 %v1599, %v1599
    %v1635 = vtanh.bf16.pop %v1603
    %v1636 = vtanh.bf16.pop %v1604
    %v1637 = vtanh.bf16.pop %v1605
    %v1638 = vtanh.bf16.pop %v1606
    %v1639 = vtanh.bf16.pop %v1607
    %v1640 = vtanh.bf16.pop %v1608
    %v1641 = vtanh.bf16.pop %v1609
    %v1642 = vtanh.bf16.pop %v1610
    %v1643 = vtanh.bf16.pop %v1611
    %v1644 = vtanh.bf16.pop %v1612
    %v1645 = vtanh.bf16.pop %v1613
    %v1646 = vtanh.bf16.pop %v1614
    %v1647 = vtanh.bf16.pop %v1615
    %v1648 = vtanh.bf16.pop %v1616
    %v1649 = vtanh.bf16.pop %v1617
    %v1650 = vtanh.bf16.pop %v1618
    %v1651 = vtanh.bf16.pop %v1619
    %v1652 = vtanh.bf16.pop %v1620
    %v1653 = vtanh.bf16.pop %v1621
    %v1654 = vtanh.bf16.pop %v1622
    %v1655 = vtanh.bf16.pop %v1623
    %v1656 = vtanh.bf16.pop %v1624
    %v1657 = vtanh.bf16.pop %v1625
    %v1658 = vtanh.bf16.pop %v1626
    %v1659 = vtanh.bf16.pop %v1627
    %v1660 = vtanh.bf16.pop %v1628
    %v1661 = vtanh.bf16.pop %v1629
    %v1662 = vtanh.bf16.pop %v1630
    %v1663 = vtanh.bf16.pop %v1631
    %v1664 = vtanh.bf16.pop %v1632
    %v1665 = vtanh.bf16.pop %v1633
    %v1666 = vtanh.bf16.pop %v1634
    %v1667 = vunpack.c.l.bf16 %v1635
    %v1668 = vunpack.c.l.bf16 %v1636
    %v1669 = vunpack.c.l.bf16 %v1637
    %v1670 = vunpack.c.l.bf16 %v1638
    %v1671 = vunpack.c.l.bf16 %v1639
    %v1672 = vunpack.c.l.bf16 %v1640
    %v1673 = vunpack.c.l.bf16 %v1641
    %v1674 = vunpack.c.l.bf16 %v1642
    %v1675 = vunpack.c.h.bf16 %v1635
    %v1676 = vunpack.c.h.bf16 %v1636
    %v1677 = vunpack.c.h.bf16 %v1637
    %v1678 = vunpack.c.h.bf16 %v1638
    %v1679 = vunpack.c.h.bf16 %v1639
    %v1680 = vunpack.c.h.bf16 %v1640
    %v1681 = vunpack.c.h.bf16 %v1641
    %v1682 = vunpack.c.h.bf16 %v1642
    %v1683 = vunpack.c.l.bf16 %v1643
    %v1684 = vunpack.c.l.bf16 %v1644
    %v1685 = vunpack.c.l.bf16 %v1645
    %v1686 = vunpack.c.l.bf16 %v1646
    %v1687 = vunpack.c.l.bf16 %v1647
    %v1688 = vunpack.c.l.bf16 %v1648
    %v1689 = vunpack.c.l.bf16 %v1649
    %v1690 = vunpack.c.l.bf16 %v1650
    %v1691 = vunpack.c.h.bf16 %v1643
    %v1692 = vunpack.c.h.bf16 %v1644
    %v1693 = vunpack.c.h.bf16 %v1645
    %v1694 = vunpack.c.h.bf16 %v1646
    %v1695 = vunpack.c.h.bf16 %v1647
    %v1696 = vunpack.c.h.bf16 %v1648
    %v1697 = vunpack.c.h.bf16 %v1649
    %v1698 = vunpack.c.h.bf16 %v1650
    %v1699 = vunpack.c.l.bf16 %v1651
    %v1700 = vunpack.c.l.bf16 %v1652
    %v1701 = vunpack.c.l.bf16 %v1653
    %v1702 = vunpack.c.l.bf16 %v1654
    %v1703 = vunpack.c.l.bf16 %v1655
    %v1704 = vunpack.c.l.bf16 %v1656
    %v1705 = vunpack.c.l.bf16 %v1657
    %v1706 = vunpack.c.l.bf16 %v1658
    %v1707 = vunpack.c.h.bf16 %v1651
    %v1708 = vunpack.c.h.bf16 %v1652
    %v1709 = vunpack.c.h.bf16 %v1653
    %v1710 = vunpack.c.h.bf16 %v1654
    %v1711 = vunpack.c.h.bf16 %v1655
    %v1712 = vunpack.c.h.bf16 %v1656
    %v1713 = vunpack.c.h.bf16 %v1657
    %v1714 = vunpack.c.h.bf16 %v1658
    %v1715 = vunpack.c.l.bf16 %v1659
    %v1716 = vunpack.c.l.bf16 %v1660
    %v1717 = vunpack.c.l.bf16 %v1661
    %v1718 = vunpack.c.l.bf16 %v1662
    %v1719 = vunpack.c.l.bf16 %v1663
    %v1720 = vunpack.c.l.bf16 %v1664
    %v1721 = vunpack.c.l.bf16 %v1665
    %v1722 = vunpack.c.l.bf16 %v1666
    %1723 = vset.pattern.permute.xlu0 2
    %1724 = vperm.xlu0 %1723, %v20
    %v1725 = vpop.permute.xlu0 %1724
    %1727 = vset.pattern.permute.xlu0 2
    %1728 = vperm.xlu0 %1727, %v21
    %v1729 = vpop.permute.xlu0 %1728
    %1731 = vset.pattern.permute.xlu0 2
    %1732 = vperm.xlu0 %1731, %v22
    %v1733 = vpop.permute.xlu0 %1732
    %1735 = vset.pattern.permute.xlu0 2
    %1736 = vperm.xlu0 %1735, %v23
    %v1737 = vpop.permute.xlu0 %1736
    %1739 = vset.pattern.permute.xlu0 2
    %1740 = vperm.xlu0 %1739, %v24
    %v1741 = vpop.permute.xlu0 %1740
    %1743 = vset.pattern.permute.xlu0 2
    %1744 = vperm.xlu0 %1743, %v25
    %v1745 = vpop.permute.xlu0 %1744
    %1747 = vset.pattern.permute.xlu0 2
    %1748 = vperm.xlu0 %1747, %v26
    %v1749 = vpop.permute.xlu0 %1748
    %v1751 = vmul.f32 %v1725, %v1667
    %v1752 = vmul.f32 %v1725, %v1668
    %v1753 = vmul.f32 %v1725, %v1669
    %v1754 = vmul.f32 %v1725, %v1670
    %v1755 = vmul.f32 %v1725, %v1671
    %v1756 = vmul.f32 %v1725, %v1672
    %v1757 = vmul.f32 %v1725, %v1673
    %v1758 = vmul.f32 %v1725, %v1674
    %v1759 = vmul.f32 %v1729, %v1675
    %v1760 = vmul.f32 %v1729, %v1676
    %v1761 = vmul.f32 %v1729, %v1677
    %v1762 = vmul.f32 %v1729, %v1678
    %v1763 = vmul.f32 %v1729, %v1679
    %v1764 = vmul.f32 %v1729, %v1680
    %v1765 = vmul.f32 %v1729, %v1681
    %v1766 = vmul.f32 %v1729, %v1682
    %v1767 = vmul.f32 %v1733, %v1683
    %v1768 = vmul.f32 %v1733, %v1684
    %v1769 = vmul.f32 %v1733, %v1685
    %v1770 = vmul.f32 %v1733, %v1686
    %v1771 = vmul.f32 %v1733, %v1687
    %v1772 = vmul.f32 %v1733, %v1688
    %v1773 = vmul.f32 %v1733, %v1689
    %v1774 = vmul.f32 %v1733, %v1690
    %v1775 = vmul.f32 %v1737, %v1691
    %v1776 = vmul.f32 %v1737, %v1692
    %v1777 = vmul.f32 %v1737, %v1693
    %v1778 = vmul.f32 %v1737, %v1694
    %v1779 = vmul.f32 %v1737, %v1695
    %v1780 = vmul.f32 %v1737, %v1696
    %v1781 = vmul.f32 %v1737, %v1697
    %v1782 = vmul.f32 %v1737, %v1698
    %v1783 = vmul.f32 %v1741, %v1699
    %v1784 = vmul.f32 %v1741, %v1700
    %v1785 = vmul.f32 %v1741, %v1701
    %v1786 = vmul.f32 %v1741, %v1702
    %v1787 = vmul.f32 %v1741, %v1703
    %v1788 = vmul.f32 %v1741, %v1704
    %v1789 = vmul.f32 %v1741, %v1705
    %v1790 = vmul.f32 %v1741, %v1706
    %v1791 = vmul.f32 %v1745, %v1707
    %v1792 = vmul.f32 %v1745, %v1708
    %v1793 = vmul.f32 %v1745, %v1709
    %v1794 = vmul.f32 %v1745, %v1710
    %v1795 = vmul.f32 %v1745, %v1711
    %v1796 = vmul.f32 %v1745, %v1712
    %v1797 = vmul.f32 %v1745, %v1713
    %v1798 = vmul.f32 %v1745, %v1714
    %v1799 = vmul.f32 %v1749, %v1715
    %v1800 = vmul.f32 %v1749, %v1716
    %v1801 = vmul.f32 %v1749, %v1717
    %v1802 = vmul.f32 %v1749, %v1718
    %v1803 = vmul.f32 %v1749, %v1719
    %v1804 = vmul.f32 %v1749, %v1720
    %v1805 = vmul.f32 %v1749, %v1721
    %v1806 = vmul.f32 %v1749, %v1722
    %v1807 = vadd.f32 %v1751, %v1759
    %v1808 = vadd.f32 %v1807, %v1767
    %v1809 = vadd.f32 %v1808, %v1775
    %v1810 = vadd.f32 %v1809, %v1783
    %v1811 = vadd.f32 %v1810, %v1791
    %vm1812 = vcmask 1041408
    %v1813 = vsel %vm1812, %v1799, 0.0
    %v1814 = vadd.f32 %v1811, %v1813
    %v1815 = vrot.slane %v1814, 4
    %v1816 = vadd.f32 %v1814, %v1815
    %v1817 = vrot.slane %v1816, 2
    %v1818 = vadd.f32 %v1816, %v1817
    %v1819 = vrot.slane %v1818, 1
    %v1820 = vadd.f32 %v1818, %v1819
    %v1821 = vadd.f32 %v1752, %v1760
    %v1822 = vadd.f32 %v1821, %v1768
    %v1823 = vadd.f32 %v1822, %v1776
    %v1824 = vadd.f32 %v1823, %v1784
    %v1825 = vadd.f32 %v1824, %v1792
    %v1826 = vsel %vm1812, %v1800, 0.0
    %v1827 = vadd.f32 %v1825, %v1826
    %v1828 = vrot.slane %v1827, 4
    %v1829 = vadd.f32 %v1827, %v1828
    %v1830 = vrot.slane %v1829, 2
    %v1831 = vadd.f32 %v1829, %v1830
    %v1832 = vrot.slane %v1831, 1
    %v1833 = vadd.f32 %v1831, %v1832
    %v1834 = vadd.f32 %v1753, %v1761
    %v1835 = vadd.f32 %v1834, %v1769
    %v1836 = vadd.f32 %v1835, %v1777
    %v1837 = vadd.f32 %v1836, %v1785
    %v1838 = vadd.f32 %v1837, %v1793
    %v1839 = vsel %vm1812, %v1801, 0.0
    %v1840 = vadd.f32 %v1838, %v1839
    %v1841 = vrot.slane %v1840, 4
    %v1842 = vadd.f32 %v1840, %v1841
    %v1843 = vrot.slane %v1842, 2
    %v1844 = vadd.f32 %v1842, %v1843
    %v1845 = vrot.slane %v1844, 1
    %v1846 = vadd.f32 %v1844, %v1845
    %v1847 = vadd.f32 %v1754, %v1762
    %v1848 = vadd.f32 %v1847, %v1770
    %v1849 = vadd.f32 %v1848, %v1778
    %v1850 = vadd.f32 %v1849, %v1786
    %v1851 = vadd.f32 %v1850, %v1794
    %v1852 = vsel %vm1812, %v1802, 0.0
    %v1853 = vadd.f32 %v1851, %v1852
    %v1854 = vrot.slane %v1853, 4
    %v1855 = vadd.f32 %v1853, %v1854
    %v1856 = vrot.slane %v1855, 2
    %v1857 = vadd.f32 %v1855, %v1856
    %v1858 = vrot.slane %v1857, 1
    %v1859 = vadd.f32 %v1857, %v1858
    %v1860 = vadd.f32 %v1755, %v1763
    %v1861 = vadd.f32 %v1860, %v1771
    %v1862 = vadd.f32 %v1861, %v1779
    %v1863 = vadd.f32 %v1862, %v1787
    %v1864 = vadd.f32 %v1863, %v1795
    %v1865 = vsel %vm1812, %v1803, 0.0
    %v1866 = vadd.f32 %v1864, %v1865
    %v1867 = vrot.slane %v1866, 4
    %v1868 = vadd.f32 %v1866, %v1867
    %v1869 = vrot.slane %v1868, 2
    %v1870 = vadd.f32 %v1868, %v1869
    %v1871 = vrot.slane %v1870, 1
    %v1872 = vadd.f32 %v1870, %v1871
    %v1873 = vadd.f32 %v1756, %v1764
    %v1874 = vadd.f32 %v1873, %v1772
    %v1875 = vadd.f32 %v1874, %v1780
    %v1876 = vadd.f32 %v1875, %v1788
    %v1877 = vadd.f32 %v1876, %v1796
    %v1878 = vsel %vm1812, %v1804, 0.0
    %v1879 = vadd.f32 %v1877, %v1878
    %v1880 = vrot.slane %v1879, 4
    %v1881 = vadd.f32 %v1879, %v1880
    %v1882 = vrot.slane %v1881, 2
    %v1883 = vadd.f32 %v1881, %v1882
    %v1884 = vrot.slane %v1883, 1
    %v1885 = vadd.f32 %v1883, %v1884
    %v1886 = vadd.f32 %v1757, %v1765
    %v1887 = vadd.f32 %v1886, %v1773
    %v1888 = vadd.f32 %v1887, %v1781
    %v1889 = vadd.f32 %v1888, %v1789
    %v1890 = vadd.f32 %v1889, %v1797
    %v1891 = vsel %vm1812, %v1805, 0.0
    %v1892 = vadd.f32 %v1890, %v1891
    %v1893 = vrot.slane %v1892, 4
    %v1894 = vadd.f32 %v1892, %v1893
    %v1895 = vrot.slane %v1894, 2
    %v1896 = vadd.f32 %v1894, %v1895
    %v1897 = vrot.slane %v1896, 1
    %v1898 = vadd.f32 %v1896, %v1897
    %v1899 = vadd.f32 %v1758, %v1766
    %v1900 = vadd.f32 %v1899, %v1774
    %v1901 = vadd.f32 %v1900, %v1782
    %v1902 = vadd.f32 %v1901, %v1790
    %v1903 = vadd.f32 %v1902, %v1798
    %v1904 = vsel %vm1812, %v1806, 0.0
    %v1905 = vadd.f32 %v1903, %v1904
    %v1906 = vrot.slane %v1905, 4
    %v1907 = vadd.f32 %v1905, %v1906
    %v1908 = vrot.slane %v1907, 2
    %v1909 = vadd.f32 %v1907, %v1908
    %v1910 = vrot.slane %v1909, 1
    %v1911 = vadd.f32 %v1909, %v1910
    %1913 = vset.pattern.permute.xlu0 3
    %1914 = vperm.xlu0 %1913, %v27
    %v1915 = vpop.permute.xlu0 %1914
    %v1917 = vadd.f32 %v1820, %v1915
    %v1918 = vadd.f32 %v1833, %v1915
    %v1919 = vadd.f32 %v1846, %v1915
    %v1920 = vadd.f32 %v1859, %v1915
    %v1921 = vadd.f32 %v1872, %v1915
    %v1922 = vadd.f32 %v1885, %v1915
    %v1923 = vadd.f32 %v1898, %v1915
    %v1924 = vadd.f32 %v1911, %v1915
    %v1933 = vcombine.low %v1917, %v1918
    %v1934 = vcombine.low %v1919, %v1920
    %v1935 = vcombine.low %v1921, %v1922
    %v1936 = vcombine.low %v1923, %v1924
    %v1938 = vunpack.c.l.s4 1966171168
    %v1939 = vunpack.c.0.s8 %v1938
    %v1940 = vlaneseq
    %v1941 = vshrl.u32 %v1940, 7
    %v1942 = vsub.s32 %v1939, %v1941
    %v1943 = vrot.slane %v1933, %v1942
    %v1945 = vunpack.c.l.s4 1966171168
    %v1946 = vunpack.c.0.s8 %v1945
    %v1947 = vlaneseq
    %v1948 = vshrl.u32 %v1947, 7
    %v1949 = vsub.s32 %v1946, %v1948
    %v1950 = vrot.slane %v1934, %v1949
    %v1952 = vunpack.c.l.s4 1966171168
    %v1953 = vunpack.c.0.s8 %v1952
    %v1954 = vlaneseq
    %v1955 = vshrl.u32 %v1954, 7
    %v1956 = vsub.s32 %v1953, %v1955
    %v1957 = vrot.slane %v1935, %v1956
    %v1959 = vunpack.c.l.s4 1966171168
    %v1960 = vunpack.c.0.s8 %v1959
    %v1961 = vlaneseq
    %v1962 = vshrl.u32 %v1961, 7
    %v1963 = vsub.s32 %v1960, %v1962
    %v1964 = vrot.slane %v1936, %v1963
    %v1965 = vcombine.low %v1943, %v1950
    %v1966 = vcombine.low %v1957, %v1964
    %v1968 = vunpack.c.l.s4 1966171168
    %v1969 = vunpack.c.0.s8 %v1968
    %v1970 = vlaneseq
    %v1971 = vshrl.u32 %v1970, 7
    %v1972 = vsub.s32 %v1969, %v1971
    %v1973 = vrot.slane %v1965, %v1972
    %v1975 = vunpack.c.l.s4 1966171168
    %v1976 = vunpack.c.0.s8 %v1975
    %v1977 = vlaneseq
    %v1978 = vshrl.u32 %v1977, 7
    %v1979 = vsub.s32 %v1976, %v1978
    %v1980 = vrot.slane %v1966, %v1979
    %v1981 = vcombine.low %v1973, %v1980
    %1983 = vst [vmem:[#allocation2] sm:$0xff] %v1981
    // Predicated region
    $region18: #{tpu_custom_call.1} parent=1 // pred_check
      _
    $region19: #{tpu_custom_call.1} parent=1 // pred_check_branch
      %1985 = sbr.rel (0) target = $region21
    $region20: #{tpu_custom_call.1} parent=1 // pred_region
      %s1987 = ssub.s32 128, 128
      %1988 = vsyncadd [#allocation3], %s1987
      %s1990 = sshll.u32 [#allocation2], 4
      %s1991 = int_to_ptr.vmem [resolvable:$true] %s1990
      %1993 = dma.vmem_to_hbm [thread:$0]  %s1991, 128, %s4, [#allocation3]
    $region21: #{tpu_custom_call.1} parent=1 // pred_fallthru
      _
    // Predicated region
    $region22: #{tpu_custom_call.1} parent=1 // pred_check
      _
    $region23: #{tpu_custom_call.1} parent=1 // pred_check_branch
      %1995 = sbr.rel (0) target = $region25
    $region24: #{tpu_custom_call.1} parent=1 // pred_region
      %1996 = dma.done [#allocation3], 128
    $region25: #{tpu_custom_call.1} parent=1 // pred_fallthru
      _
    %1997 = vsyncpa [#allocation3], 1

</llo_original>
